<compile_context>
chip_gen: v7x
topology: tpu7x:2x2x1
jax: 0.10.0
libtpu: 0.0.40
codegen_flags: <defaults>
</compile_context>

<pallas_src>
import functools

import jax
import jax.numpy as jnp
from jax import lax
from jax.experimental import pallas as pl
from jax.experimental.pallas import tpu as pltpu


def _vmem_capacity_bytes(default=64 * 1024 * 1024):
    """Per-core VMEM capacity; conservative (v7x) fallback if the query fails."""
    try:
        return int(pltpu.get_tpu_info().vmem_capacity_bytes)
    except Exception:
        return default


def _heads_per_group(num_heads, head_dim, lane_target=128):
    """Smallest divisor of num_heads whose combined store width reaches 128 lanes."""
    for g in range(1, num_heads + 1):
        if num_heads % g == 0 and g * head_dim >= lane_target:
            return g
    return num_heads


def _choose_block_b(batch, seq_pad, dim, itemsize, vmem_budget, target_rows):
    """Largest divisor of `batch` folded per grid step, under a VMEM budget.

    Caps block_b so the grid has >= 2 steps whenever batch >= 2 (keeps both v7x
    TensorCores busy with dimension_semantics=("parallel",); costless on
    single-TC v5e/v6e).
    """
    # Weights are single-buffered (pl.Buffered(1)).
    weight_bytes = (dim * 3 * dim + dim * dim + dim) * itemsize
    # Per row: x block + out block (double-buffered) + qkv scratch + y scratch
    # (input dtype) + transient f32 qkv value; plus live f32 (N, N) score tiles.
    per_row = dim * (itemsize * (2 + 2 + 3 + 1) + 4 * 4)
    per_batch = seq_pad * per_row + 2 * seq_pad * seq_pad * 4
    max_bb = batch // 2 if batch >= 2 else 1
    best = 1
    for bb in range(1, max_bb + 1):
        if batch % bb:
            continue
        if weight_bytes + bb * per_batch > vmem_budget:
            break
        best = bb
        if bb * seq_pad >= target_rows:
            break
    return best


def _attention_kernel(x_ref, wqkv_ref, wproj_ref, bproj_ref, o_ref,
                      qkv_ref, y_ref, *, num_heads, block_b, seq, valid_len,
                      dim, heads_per_group, approx_reciprocal, loop_unroll):
    """One row-block (block_b full, padded sequences) per grid step."""
    head_dim = dim // num_heads
    num_groups = num_heads // heads_per_group
    group_width = heads_per_group * head_dim
    scale = head_dim ** (-0.5)

    x = x_ref[...]                        # (block_b*seq, C), native dtype
    dt = x.dtype

    # Fused QKV projection for the whole row block (MXU, f32 accumulate).
    qkv = jnp.dot(x, wqkv_ref[...], preferred_element_type=jnp.float32)  # (M, 3C)

    # Fold the softmax scale into q (one (M, C) VPU mul) and stage q/k/v in the
    # input dtype in VMEM scratch; the per-batch loop below slices the scratch
    # with dynamic *row* offsets only (per-head lane offsets stay static).
    qkv_ref[:, 0:dim] = (qkv[:, 0:dim] * scale).astype(dt)
    qkv_ref[:, dim:3 * dim] = qkv[:, dim:3 * dim].astype(dt)

    masked = valid_len != seq
    if masked:
        # Padded key columns (>= valid_len) are excluded from every softmax.
        key_ok = lax.broadcasted_iota(jnp.int32, (seq, seq), 1) < valid_len

    def body(b, carry):
        r0 = pl.multiple_of(b * seq, 8)       # row offset of this batch element
        for g in range(num_groups):           # static: lane offsets constant
            outs = []
            for hh in range(heads_per_group):
                c0 = (g * heads_per_group + hh) * head_dim
                qh = qkv_ref[pl.ds(r0, seq), 0 * dim + c0:0 * dim + c0 + head_dim]
                kh = qkv_ref[pl.ds(r0, seq), 1 * dim + c0:1 * dim + c0 + head_dim]
                vh = qkv_ref[pl.ds(r0, seq), 2 * dim + c0:2 * dim + c0 + head_dim]

                # q @ k^T without materializing a transpose: contract last dims.
                s = lax.dot_general(qh, kh, (((1,), (1,)), ((), ())),
                                    preferred_element_type=jnp.float32)  # (N, N)
                if masked:
                    s = jnp.where(key_ok, s, jnp.float32(-1e30))

                # Numerically-stable softmax numerator only (f32).
                s = s - jnp.max(s, axis=-1, keepdims=True)
                p = jnp.exp(s)
                denom = jnp.sum(p, axis=-1, keepdims=True)

                # PV matmul first, then normalize the (N, D) result instead of
                # the (N, N) probabilities; divide via EUP reciprocal.
                yh = jnp.dot(p.astype(dt), vh, preferred_element_type=jnp.float32)
                yh = yh * pl.reciprocal(denom, approx=approx_reciprocal)
                outs.append(yh.astype(dt))

            # One lane-dense store per head group (>= 128 lanes when D*group >= 128).
            slab = outs[0] if len(outs) == 1 else jnp.concatenate(outs, axis=-1)
            y_ref[pl.ds(r0, seq), g * group_width:(g + 1) * group_width] = slab
        return carry

    lax.fori_loop(0, block_b, body, 0, unroll=loop_unroll)

    # Output projection + bias on the whole row block (MXU, f32 accumulate).
    out = jnp.dot(y_ref[...], wproj_ref[...], preferred_element_type=jnp.float32)
    out = out + bproj_ref[...].astype(jnp.float32)                  # (1, C) bcast
    o_ref[...] = out.astype(o_ref.dtype)


def attention_pallas(x, w_qkv, w_proj, b_proj, num_heads, *, block_b=None,
                     approx_reciprocal=True):
    B, N, C = x.shape
    assert C % num_heads == 0, "dim must be divisible by num_heads"
    head_dim = C // num_heads
    if b_proj.ndim == 1:
        b_proj = b_proj.reshape(1, C)

    itemsize = jnp.dtype(x.dtype).itemsize
    row_align = {4: 8, 2: 16, 1: 32}.get(itemsize, 8)

    # Pad the sequence to the sublane multiple; padded keys are masked inside the
    # kernel so softmax semantics are unchanged (fixes N=17 spatial attention).
    n_pad = ((N + row_align - 1) // row_align) * row_align
    if n_pad != N:
        x = jnp.pad(x, ((0, 0), (0, n_pad - N), (0, 0)))

    # Generation-aware VMEM budgeting: ~48 MiB limit on v7x (64 MiB VMEM),
    # ~96 MiB on v5e/v6e (128 MiB); bigger row-block target on big-VMEM chips.
    vmem_cap = _vmem_capacity_bytes()
    vmem_limit = min(vmem_cap * 3 // 4, 96 * 1024 * 1024)
    target_rows = 512 if vmem_cap > 96 * 1024 * 1024 else 256

    if block_b is None:
        block_b = _choose_block_b(B, n_pad, C, itemsize,
                                  vmem_budget=vmem_limit - 8 * 1024 * 1024,
                                  target_rows=target_rows)
    assert B % block_b == 0, "block_b must divide B"
    num_blocks = B // block_b
    block_m = block_b * n_pad

    heads_per_group = _heads_per_group(num_heads, head_dim)
    loop_unroll = (block_b * num_heads) <= 16

    # Present x / out as lane-friendly 2-D (B*Npad, C) slabs (free XLA reshapes).
    x2 = x.reshape(B * n_pad, C)

    kernel = functools.partial(
        _attention_kernel, num_heads=num_heads, block_b=block_b, seq=n_pad,
        valid_len=N, dim=C, heads_per_group=heads_per_group,
        approx_reciprocal=approx_reciprocal, loop_unroll=loop_unroll)

    # Constant operands: index_map never changes across the grid, so a single
    # buffer suffices (saves one copy of the weights in VMEM).
    wqkv_spec = pl.BlockSpec((C, 3 * C), lambda i: (0, 0),
                             pipeline_mode=pl.Buffered(1))
    wproj_spec = pl.BlockSpec((C, C), lambda i: (0, 0),
                              pipeline_mode=pl.Buffered(1))
    bproj_spec = pl.BlockSpec((1, C), lambda i: (0, 0),
                              pipeline_mode=pl.Buffered(1))

    out2 = pl.pallas_call(
        kernel,
        out_shape=jax.ShapeDtypeStruct((B * n_pad, C), x.dtype),
        grid_spec=pltpu.PrefetchScalarGridSpec(
            num_scalar_prefetch=0,
            grid=(num_blocks,),
            in_specs=[
                pl.BlockSpec((block_m, C), lambda i: (i, 0)),   # x row block
                wqkv_spec, wproj_spec, bproj_spec,
            ],
            out_specs=pl.BlockSpec((block_m, C), lambda i: (i, 0)),
            scratch_shapes=[
                pltpu.VMEM((block_m, 3 * C), x.dtype),   # staged (scaled-q, k, v)
                pltpu.VMEM((block_m, C), x.dtype),       # head outputs
            ],
        ),
        compiler_params=pltpu.CompilerParams(
            # Row-block axis is independent -> both v7x TensorCores get work
            # (grid is guaranteed >= 2 whenever B >= 2 by the chooser cap).
            dimension_semantics=("parallel",),
            vmem_limit_bytes=int(vmem_limit),
        ),
    )(x2, w_qkv, w_proj, b_proj)

    out = out2.reshape(B, n_pad, C)
    return out[:, :N, :] if n_pad != N else out


def attention_reference(x, w_qkv, w_proj, b_proj, num_heads):
    """Pure-JAX reference mirroring the PyTorch forward (comb=False)."""
    B, N, C = x.shape
    D = C // num_heads
    scale = D ** (-0.5)
    qkv = x @ w_qkv                                       # (B, N, 3C)
    qkv = qkv.reshape(B, N, 3, num_heads, D).transpose(2, 0, 3, 1, 4)
    q, k, v = qkv[0], qkv[1], qkv[2]                      # (B, H, N, D)
    attn = jnp.einsum('bhnd,bhmd->bhnm', q, k) * scale
    attn = jax.nn.softmax(attn, axis=-1)
    y = jnp.einsum('bhnm,bhmd->bhnd', attn, v)            # (B, H, N, D)
    y = y.transpose(0, 2, 1, 3).reshape(B, N, C)
    return y @ w_proj + b_proj


if __name__ == "__main__":
    # Small shapes consistent with the module (dim=32, num_heads=8).
    # N=8 exercises the aligned path; N=17 (MixSTE spatial joints) exercises the
    # padded + key-masked path.
    configs = [
        (2, 8, 32, 8),
        (2, 17, 32, 8),
    ]
    key = jax.random.PRNGKey(0)
    for (B, N, C, H) in configs:
        key, kx, kq, kp, kb = jax.random.split(key, 5)
        x = jax.random.normal(kx, (B, N, C), dtype=jnp.float32)
        # qkv_bias=False in the module; proj has bias.
        w_qkv = jax.random.normal(kq, (C, 3 * C), dtype=jnp.float32) * 0.05
        w_proj = jax.random.normal(kp, (C, C), dtype=jnp.float32) * 0.05
        b_proj = jax.random.normal(kb, (C,), dtype=jnp.float32) * 0.01

        out = attention_pallas(x, w_qkv, w_proj, b_proj, H)
        out = jax.block_until_ready(out)

        ref = attention_reference(x, w_qkv, w_proj, b_proj, H)
        assert out.shape == (B, N, C)
        # Tolerance covers the approximate EUP reciprocal in the softmax divide.
        assert jnp.allclose(out, ref, atol=2e-3, rtol=2e-3), \
            f"mismatch vs reference for shape {(B, N, C, H)}"

    print("KERNEL_OK")
</pallas_src>

<mosaic_0001>
module attributes {stable_mosaic.version = 11 : i64} {
  func.func @_attention_kernel(%arg0: i32, %arg1: memref<8x32xf32, #tpu.memory_space<vmem>>, %arg2: memref<32x96xf32, #tpu.memory_space<vmem>>, %arg3: memref<32x32xf32, #tpu.memory_space<vmem>>, %arg4: memref<1x32xf32, #tpu.memory_space<vmem>>, %arg5: memref<8x32xf32, #tpu.memory_space<vmem>>, %arg6: memref<8x96xf32, #tpu.memory_space<vmem>>, %arg7: memref<8x32xf32, #tpu.memory_space<vmem>>) attributes {dimension_semantics = [#tpu.dimension_semantics<parallel>], iteration_bounds = array<i64: 2>, scalar_prefetch = 0 : i64, scratch_operands = 2 : i64, tpu.core_type = #tpu.core_type<tc>, window_params = [{transform_indices = @transform_0, window_bounds = array<i64: 8, 32>}, {pipeline_mode = #tpu.pipeline_mode<synchronous>, transform_indices = @transform_1, window_bounds = array<i64: 32, 96>}, {pipeline_mode = #tpu.pipeline_mode<synchronous>, transform_indices = @transform_2, window_bounds = array<i64: 32, 32>}, {pipeline_mode = #tpu.pipeline_mode<synchronous>, transform_indices = @transform_3, window_bounds = array<i64: 1, 32>}, {transform_indices = @transform_4, window_bounds = array<i64: 8, 32>}]} {
    %c0 = arith.constant 0 : index
    %c0_0 = arith.constant 0 : index
    %0 = vector.load %arg1[%c0, %c0_0] : memref<8x32xf32, #tpu.memory_space<vmem>>, vector<8x32xf32>
    %c0_1 = arith.constant 0 : index
    %c0_2 = arith.constant 0 : index
    %1 = vector.load %arg2[%c0_1, %c0_2] : memref<32x96xf32, #tpu.memory_space<vmem>>, vector<32x96xf32>
    %cst = arith.constant dense<0.000000e+00> : vector<8x96xf32>
    %2 = tpu.matmul %0, %1, %cst {dimension_numbers = #tpu.dot_dimension_numbers<[1], [0], [0], [1], [0, 0, 1, 1], [], []>} : vector<8x32xf32>, vector<32x96xf32>, vector<8x96xf32> -> vector<8x96xf32>
    %3 = vector.extract_strided_slice %2 {offsets = [0, 0], sizes = [8, 32], strides = [1, 1]} : vector<8x96xf32> to vector<8x32xf32>
    %cst_3 = arith.constant 5.000000e-01 : f32
    %4 = vector.broadcast %cst_3 : f32 to vector<8x32xf32>
    %5 = arith.mulf %3, %4 : vector<8x32xf32>
    %c0_4 = arith.constant 0 : index
    %c0_5 = arith.constant 0 : index
    %6 = vector.load %arg6[%c0_4, %c0_5] : memref<8x96xf32, #tpu.memory_space<vmem>>, vector<8x32xf32>
    tpu.vector_store %arg6[%c0_4, %c0_5], %5 {strides = array<i32>} : memref<8x96xf32, #tpu.memory_space<vmem>>, vector<8x32xf32>,
    %7 = vector.extract_strided_slice %2 {offsets = [0, 32], sizes = [8, 64], strides = [1, 1]} : vector<8x96xf32> to vector<8x64xf32>
    %c0_6 = arith.constant 0 : index
    %c32 = arith.constant 32 : index
    %8 = vector.load %arg6[%c0_6, %c32] : memref<8x96xf32, #tpu.memory_space<vmem>>, vector<8x64xf32>
    tpu.vector_store %arg6[%c0_6, %c32], %7 {strides = array<i32>} : memref<8x96xf32, #tpu.memory_space<vmem>>, vector<8x64xf32>,
    %c0_i32 = arith.constant 0 : i32
    %c8_i32 = arith.constant 8 : i32
    %9 = arith.muli %c0_i32, %c8_i32 : i32
    %10 = tpu.assume_multiple %9, 8 : i32
    %11 = arith.index_cast %10 : i32 to index
    %c0_7 = arith.constant 0 : index
    %12 = vector.load %arg6[%11, %c0_7] : memref<8x96xf32, #tpu.memory_space<vmem>>, vector<8x4xf32>
    %13 = arith.index_cast %10 : i32 to index
    %c32_8 = arith.constant 32 : index
    %14 = vector.load %arg6[%13, %c32_8] : memref<8x96xf32, #tpu.memory_space<vmem>>, vector<8x4xf32>
    %15 = arith.index_cast %10 : i32 to index
    %c64 = arith.constant 64 : index
    %16 = vector.load %arg6[%15, %c64] : memref<8x96xf32, #tpu.memory_space<vmem>>, vector<8x4xf32>
    %cst_9 = arith.constant dense<0.000000e+00> : vector<8x8xf32>
    %17 = tpu.matmul %12, %14, %cst_9 {dimension_numbers = #tpu.dot_dimension_numbers<[1], [1], [0], [0], [0, 0, 1, 0], [], []>} : vector<8x4xf32>, vector<8x4xf32>, vector<8x8xf32> -> vector<8x8xf32>
    %cst_10 = arith.constant dense<0xFF800000> : vector<8xf32>
    %18 = vector.multi_reduction <maximumf>, %17, %cst_10 [1] : vector<8x8xf32> to vector<8xf32>
    %19 = vector.shape_cast %18 : vector<8xf32> to vector<8x1xf32>
    %20 = vector.broadcast %19 : vector<8x1xf32> to vector<8x8xf32>
    %21 = arith.subf %17, %20 : vector<8x8xf32>
    %22 = math.exp %21 : vector<8x8xf32>
    %cst_11 = arith.constant dense<0.000000e+00> : vector<8xf32>
    %23 = vector.multi_reduction <add>, %22, %cst_11 [1] : vector<8x8xf32> to vector<8xf32>
    %24 = vector.shape_cast %23 : vector<8xf32> to vector<8x1xf32>
    %cst_12 = arith.constant dense<0.000000e+00> : vector<8x4xf32>
    %25 = tpu.matmul %22, %16, %cst_12 {dimension_numbers = #tpu.dot_dimension_numbers<[1], [0], [0], [1], [0, 0, 1, 1], [], []>} : vector<8x8xf32>, vector<8x4xf32>, vector<8x4xf32> -> vector<8x4xf32>
    %26 = tpu.reciprocal %24 {approx = true} : vector<8x1xf32> -> vector<8x1xf32>
    %27 = vector.broadcast %26 : vector<8x1xf32> to vector<8x4xf32>
    %28 = arith.mulf %25, %27 : vector<8x4xf32>
    %29 = arith.index_cast %10 : i32 to index
    %c4 = arith.constant 4 : index
    %30 = vector.load %arg6[%29, %c4] : memref<8x96xf32, #tpu.memory_space<vmem>>, vector<8x4xf32>
    %31 = arith.index_cast %10 : i32 to index
    %c36 = arith.constant 36 : index
    %32 = vector.load %arg6[%31, %c36] : memref<8x96xf32, #tpu.memory_space<vmem>>, vector<8x4xf32>
    %33 = arith.index_cast %10 : i32 to index
    %c68 = arith.constant 68 : index
    %34 = vector.load %arg6[%33, %c68] : memref<8x96xf32, #tpu.memory_space<vmem>>, vector<8x4xf32>
    %cst_13 = arith.constant dense<0.000000e+00> : vector<8x8xf32>
    %35 = tpu.matmul %30, %32, %cst_13 {dimension_numbers = #tpu.dot_dimension_numbers<[1], [1], [0], [0], [0, 0, 1, 0], [], []>} : vector<8x4xf32>, vector<8x4xf32>, vector<8x8xf32> -> vector<8x8xf32>
    %cst_14 = arith.constant dense<0xFF800000> : vector<8xf32>
    %36 = vector.multi_reduction <maximumf>, %35, %cst_14 [1] : vector<8x8xf32> to vector<8xf32>
    %37 = vector.shape_cast %36 : vector<8xf32> to vector<8x1xf32>
    %38 = vector.broadcast %37 : vector<8x1xf32> to vector<8x8xf32>
    %39 = arith.subf %35, %38 : vector<8x8xf32>
    %40 = math.exp %39 : vector<8x8xf32>
    %cst_15 = arith.constant dense<0.000000e+00> : vector<8xf32>
    %41 = vector.multi_reduction <add>, %40, %cst_15 [1] : vector<8x8xf32> to vector<8xf32>
    %42 = vector.shape_cast %41 : vector<8xf32> to vector<8x1xf32>
    %cst_16 = arith.constant dense<0.000000e+00> : vector<8x4xf32>
    %43 = tpu.matmul %40, %34, %cst_16 {dimension_numbers = #tpu.dot_dimension_numbers<[1], [0], [0], [1], [0, 0, 1, 1], [], []>} : vector<8x8xf32>, vector<8x4xf32>, vector<8x4xf32> -> vector<8x4xf32>
    %44 = tpu.reciprocal %42 {approx = true} : vector<8x1xf32> -> vector<8x1xf32>
    %45 = vector.broadcast %44 : vector<8x1xf32> to vector<8x4xf32>
    %46 = arith.mulf %43, %45 : vector<8x4xf32>
    %47 = arith.index_cast %10 : i32 to index
    %c8 = arith.constant 8 : index
    %48 = vector.load %arg6[%47, %c8] : memref<8x96xf32, #tpu.memory_space<vmem>>, vector<8x4xf32>
    %49 = arith.index_cast %10 : i32 to index
    %c40 = arith.constant 40 : index
    %50 = vector.load %arg6[%49, %c40] : memref<8x96xf32, #tpu.memory_space<vmem>>, vector<8x4xf32>
    %51 = arith.index_cast %10 : i32 to index
    %c72 = arith.constant 72 : index
    %52 = vector.load %arg6[%51, %c72] : memref<8x96xf32, #tpu.memory_space<vmem>>, vector<8x4xf32>
    %cst_17 = arith.constant dense<0.000000e+00> : vector<8x8xf32>
    %53 = tpu.matmul %48, %50, %cst_17 {dimension_numbers = #tpu.dot_dimension_numbers<[1], [1], [0], [0], [0, 0, 1, 0], [], []>} : vector<8x4xf32>, vector<8x4xf32>, vector<8x8xf32> -> vector<8x8xf32>
    %cst_18 = arith.constant dense<0xFF800000> : vector<8xf32>
    %54 = vector.multi_reduction <maximumf>, %53, %cst_18 [1] : vector<8x8xf32> to vector<8xf32>
    %55 = vector.shape_cast %54 : vector<8xf32> to vector<8x1xf32>
    %56 = vector.broadcast %55 : vector<8x1xf32> to vector<8x8xf32>
    %57 = arith.subf %53, %56 : vector<8x8xf32>
    %58 = math.exp %57 : vector<8x8xf32>
    %cst_19 = arith.constant dense<0.000000e+00> : vector<8xf32>
    %59 = vector.multi_reduction <add>, %58, %cst_19 [1] : vector<8x8xf32> to vector<8xf32>
    %60 = vector.shape_cast %59 : vector<8xf32> to vector<8x1xf32>
    %cst_20 = arith.constant dense<0.000000e+00> : vector<8x4xf32>
    %61 = tpu.matmul %58, %52, %cst_20 {dimension_numbers = #tpu.dot_dimension_numbers<[1], [0], [0], [1], [0, 0, 1, 1], [], []>} : vector<8x8xf32>, vector<8x4xf32>, vector<8x4xf32> -> vector<8x4xf32>
    %62 = tpu.reciprocal %60 {approx = true} : vector<8x1xf32> -> vector<8x1xf32>
    %63 = vector.broadcast %62 : vector<8x1xf32> to vector<8x4xf32>
    %64 = arith.mulf %61, %63 : vector<8x4xf32>
    %65 = arith.index_cast %10 : i32 to index
    %c12 = arith.constant 12 : index
    %66 = vector.load %arg6[%65, %c12] : memref<8x96xf32, #tpu.memory_space<vmem>>, vector<8x4xf32>
    %67 = arith.index_cast %10 : i32 to index
    %c44 = arith.constant 44 : index
    %68 = vector.load %arg6[%67, %c44] : memref<8x96xf32, #tpu.memory_space<vmem>>, vector<8x4xf32>
    %69 = arith.index_cast %10 : i32 to index
    %c76 = arith.constant 76 : index
    %70 = vector.load %arg6[%69, %c76] : memref<8x96xf32, #tpu.memory_space<vmem>>, vector<8x4xf32>
    %cst_21 = arith.constant dense<0.000000e+00> : vector<8x8xf32>
    %71 = tpu.matmul %66, %68, %cst_21 {dimension_numbers = #tpu.dot_dimension_numbers<[1], [1], [0], [0], [0, 0, 1, 0], [], []>} : vector<8x4xf32>, vector<8x4xf32>, vector<8x8xf32> -> vector<8x8xf32>
    %cst_22 = arith.constant dense<0xFF800000> : vector<8xf32>
    %72 = vector.multi_reduction <maximumf>, %71, %cst_22 [1] : vector<8x8xf32> to vector<8xf32>
    %73 = vector.shape_cast %72 : vector<8xf32> to vector<8x1xf32>
    %74 = vector.broadcast %73 : vector<8x1xf32> to vector<8x8xf32>
    %75 = arith.subf %71, %74 : vector<8x8xf32>
    %76 = math.exp %75 : vector<8x8xf32>
    %cst_23 = arith.constant dense<0.000000e+00> : vector<8xf32>
    %77 = vector.multi_reduction <add>, %76, %cst_23 [1] : vector<8x8xf32> to vector<8xf32>
    %78 = vector.shape_cast %77 : vector<8xf32> to vector<8x1xf32>
    %cst_24 = arith.constant dense<0.000000e+00> : vector<8x4xf32>
    %79 = tpu.matmul %76, %70, %cst_24 {dimension_numbers = #tpu.dot_dimension_numbers<[1], [0], [0], [1], [0, 0, 1, 1], [], []>} : vector<8x8xf32>, vector<8x4xf32>, vector<8x4xf32> -> vector<8x4xf32>
    %80 = tpu.reciprocal %78 {approx = true} : vector<8x1xf32> -> vector<8x1xf32>
    %81 = vector.broadcast %80 : vector<8x1xf32> to vector<8x4xf32>
    %82 = arith.mulf %79, %81 : vector<8x4xf32>
    %83 = arith.index_cast %10 : i32 to index
    %c16 = arith.constant 16 : index
    %84 = vector.load %arg6[%83, %c16] : memref<8x96xf32, #tpu.memory_space<vmem>>, vector<8x4xf32>
    %85 = arith.index_cast %10 : i32 to index
    %c48 = arith.constant 48 : index
    %86 = vector.load %arg6[%85, %c48] : memref<8x96xf32, #tpu.memory_space<vmem>>, vector<8x4xf32>
    %87 = arith.index_cast %10 : i32 to index
    %c80 = arith.constant 80 : index
    %88 = vector.load %arg6[%87, %c80] : memref<8x96xf32, #tpu.memory_space<vmem>>, vector<8x4xf32>
    %cst_25 = arith.constant dense<0.000000e+00> : vector<8x8xf32>
    %89 = tpu.matmul %84, %86, %cst_25 {dimension_numbers = #tpu.dot_dimension_numbers<[1], [1], [0], [0], [0, 0, 1, 0], [], []>} : vector<8x4xf32>, vector<8x4xf32>, vector<8x8xf32> -> vector<8x8xf32>
    %cst_26 = arith.constant dense<0xFF800000> : vector<8xf32>
    %90 = vector.multi_reduction <maximumf>, %89, %cst_26 [1] : vector<8x8xf32> to vector<8xf32>
    %91 = vector.shape_cast %90 : vector<8xf32> to vector<8x1xf32>
    %92 = vector.broadcast %91 : vector<8x1xf32> to vector<8x8xf32>
    %93 = arith.subf %89, %92 : vector<8x8xf32>
    %94 = math.exp %93 : vector<8x8xf32>
    %cst_27 = arith.constant dense<0.000000e+00> : vector<8xf32>
    %95 = vector.multi_reduction <add>, %94, %cst_27 [1] : vector<8x8xf32> to vector<8xf32>
    %96 = vector.shape_cast %95 : vector<8xf32> to vector<8x1xf32>
    %cst_28 = arith.constant dense<0.000000e+00> : vector<8x4xf32>
    %97 = tpu.matmul %94, %88, %cst_28 {dimension_numbers = #tpu.dot_dimension_numbers<[1], [0], [0], [1], [0, 0, 1, 1], [], []>} : vector<8x8xf32>, vector<8x4xf32>, vector<8x4xf32> -> vector<8x4xf32>
    %98 = tpu.reciprocal %96 {approx = true} : vector<8x1xf32> -> vector<8x1xf32>
    %99 = vector.broadcast %98 : vector<8x1xf32> to vector<8x4xf32>
    %100 = arith.mulf %97, %99 : vector<8x4xf32>
    %101 = arith.index_cast %10 : i32 to index
    %c20 = arith.constant 20 : index
    %102 = vector.load %arg6[%101, %c20] : memref<8x96xf32, #tpu.memory_space<vmem>>, vector<8x4xf32>
    %103 = arith.index_cast %10 : i32 to index
    %c52 = arith.constant 52 : index
    %104 = vector.load %arg6[%103, %c52] : memref<8x96xf32, #tpu.memory_space<vmem>>, vector<8x4xf32>
    %105 = arith.index_cast %10 : i32 to index
    %c84 = arith.constant 84 : index
    %106 = vector.load %arg6[%105, %c84] : memref<8x96xf32, #tpu.memory_space<vmem>>, vector<8x4xf32>
    %cst_29 = arith.constant dense<0.000000e+00> : vector<8x8xf32>
    %107 = tpu.matmul %102, %104, %cst_29 {dimension_numbers = #tpu.dot_dimension_numbers<[1], [1], [0], [0], [0, 0, 1, 0], [], []>} : vector<8x4xf32>, vector<8x4xf32>, vector<8x8xf32> -> vector<8x8xf32>
    %cst_30 = arith.constant dense<0xFF800000> : vector<8xf32>
    %108 = vector.multi_reduction <maximumf>, %107, %cst_30 [1] : vector<8x8xf32> to vector<8xf32>
    %109 = vector.shape_cast %108 : vector<8xf32> to vector<8x1xf32>
    %110 = vector.broadcast %109 : vector<8x1xf32> to vector<8x8xf32>
    %111 = arith.subf %107, %110 : vector<8x8xf32>
    %112 = math.exp %111 : vector<8x8xf32>
    %cst_31 = arith.constant dense<0.000000e+00> : vector<8xf32>
    %113 = vector.multi_reduction <add>, %112, %cst_31 [1] : vector<8x8xf32> to vector<8xf32>
    %114 = vector.shape_cast %113 : vector<8xf32> to vector<8x1xf32>
    %cst_32 = arith.constant dense<0.000000e+00> : vector<8x4xf32>
    %115 = tpu.matmul %112, %106, %cst_32 {dimension_numbers = #tpu.dot_dimension_numbers<[1], [0], [0], [1], [0, 0, 1, 1], [], []>} : vector<8x8xf32>, vector<8x4xf32>, vector<8x4xf32> -> vector<8x4xf32>
    %116 = tpu.reciprocal %114 {approx = true} : vector<8x1xf32> -> vector<8x1xf32>
    %117 = vector.broadcast %116 : vector<8x1xf32> to vector<8x4xf32>
    %118 = arith.mulf %115, %117 : vector<8x4xf32>
    %119 = arith.index_cast %10 : i32 to index
    %c24 = arith.constant 24 : index
    %120 = vector.load %arg6[%119, %c24] : memref<8x96xf32, #tpu.memory_space<vmem>>, vector<8x4xf32>
    %121 = arith.index_cast %10 : i32 to index
    %c56 = arith.constant 56 : index
    %122 = vector.load %arg6[%121, %c56] : memref<8x96xf32, #tpu.memory_space<vmem>>, vector<8x4xf32>
    %123 = arith.index_cast %10 : i32 to index
    %c88 = arith.constant 88 : index
    %124 = vector.load %arg6[%123, %c88] : memref<8x96xf32, #tpu.memory_space<vmem>>, vector<8x4xf32>
    %cst_33 = arith.constant dense<0.000000e+00> : vector<8x8xf32>
    %125 = tpu.matmul %120, %122, %cst_33 {dimension_numbers = #tpu.dot_dimension_numbers<[1], [1], [0], [0], [0, 0, 1, 0], [], []>} : vector<8x4xf32>, vector<8x4xf32>, vector<8x8xf32> -> vector<8x8xf32>
    %cst_34 = arith.constant dense<0xFF800000> : vector<8xf32>
    %126 = vector.multi_reduction <maximumf>, %125, %cst_34 [1] : vector<8x8xf32> to vector<8xf32>
    %127 = vector.shape_cast %126 : vector<8xf32> to vector<8x1xf32>
    %128 = vector.broadcast %127 : vector<8x1xf32> to vector<8x8xf32>
    %129 = arith.subf %125, %128 : vector<8x8xf32>
    %130 = math.exp %129 : vector<8x8xf32>
    %cst_35 = arith.constant dense<0.000000e+00> : vector<8xf32>
    %131 = vector.multi_reduction <add>, %130, %cst_35 [1] : vector<8x8xf32> to vector<8xf32>
    %132 = vector.shape_cast %131 : vector<8xf32> to vector<8x1xf32>
    %cst_36 = arith.constant dense<0.000000e+00> : vector<8x4xf32>
    %133 = tpu.matmul %130, %124, %cst_36 {dimension_numbers = #tpu.dot_dimension_numbers<[1], [0], [0], [1], [0, 0, 1, 1], [], []>} : vector<8x8xf32>, vector<8x4xf32>, vector<8x4xf32> -> vector<8x4xf32>
    %134 = tpu.reciprocal %132 {approx = true} : vector<8x1xf32> -> vector<8x1xf32>
    %135 = vector.broadcast %134 : vector<8x1xf32> to vector<8x4xf32>
    %136 = arith.mulf %133, %135 : vector<8x4xf32>
    %137 = arith.index_cast %10 : i32 to index
    %c28 = arith.constant 28 : index
    %138 = vector.load %arg6[%137, %c28] : memref<8x96xf32, #tpu.memory_space<vmem>>, vector<8x4xf32>
    %139 = arith.index_cast %10 : i32 to index
    %c60 = arith.constant 60 : index
    %140 = vector.load %arg6[%139, %c60] : memref<8x96xf32, #tpu.memory_space<vmem>>, vector<8x4xf32>
    %141 = arith.index_cast %10 : i32 to index
    %c92 = arith.constant 92 : index
    %142 = vector.load %arg6[%141, %c92] : memref<8x96xf32, #tpu.memory_space<vmem>>, vector<8x4xf32>
    %cst_37 = arith.constant dense<0.000000e+00> : vector<8x8xf32>
    %143 = tpu.matmul %138, %140, %cst_37 {dimension_numbers = #tpu.dot_dimension_numbers<[1], [1], [0], [0], [0, 0, 1, 0], [], []>} : vector<8x4xf32>, vector<8x4xf32>, vector<8x8xf32> -> vector<8x8xf32>
    %cst_38 = arith.constant dense<0xFF800000> : vector<8xf32>
    %144 = vector.multi_reduction <maximumf>, %143, %cst_38 [1] : vector<8x8xf32> to vector<8xf32>
    %145 = vector.shape_cast %144 : vector<8xf32> to vector<8x1xf32>
    %146 = vector.broadcast %145 : vector<8x1xf32> to vector<8x8xf32>
    %147 = arith.subf %143, %146 : vector<8x8xf32>
    %148 = math.exp %147 : vector<8x8xf32>
    %cst_39 = arith.constant dense<0.000000e+00> : vector<8xf32>
    %149 = vector.multi_reduction <add>, %148, %cst_39 [1] : vector<8x8xf32> to vector<8xf32>
    %150 = vector.shape_cast %149 : vector<8xf32> to vector<8x1xf32>
    %cst_40 = arith.constant dense<0.000000e+00> : vector<8x4xf32>
    %151 = tpu.matmul %148, %142, %cst_40 {dimension_numbers = #tpu.dot_dimension_numbers<[1], [0], [0], [1], [0, 0, 1, 1], [], []>} : vector<8x8xf32>, vector<8x4xf32>, vector<8x4xf32> -> vector<8x4xf32>
    %152 = tpu.reciprocal %150 {approx = true} : vector<8x1xf32> -> vector<8x1xf32>
    %153 = vector.broadcast %152 : vector<8x1xf32> to vector<8x4xf32>
    %154 = arith.mulf %151, %153 : vector<8x4xf32>
    %155 = tpu.concatenate %28, %46, %64, %82, %100, %118, %136, %154 in 1 : vector<8x4xf32>, vector<8x4xf32>, vector<8x4xf32>, vector<8x4xf32>, vector<8x4xf32>, vector<8x4xf32>, vector<8x4xf32>, vector<8x4xf32> -> vector<8x32xf32>
    %156 = arith.index_cast %10 : i32 to index
    %c0_41 = arith.constant 0 : index
    %157 = vector.load %arg7[%156, %c0_41] : memref<8x32xf32, #tpu.memory_space<vmem>>, vector<8x32xf32>
    tpu.vector_store %arg7[%156, %c0_41], %155 {strides = array<i32>} : memref<8x32xf32, #tpu.memory_space<vmem>>, vector<8x32xf32>,
    %c1_i32 = arith.constant 1 : i32
    %c0_42 = arith.constant 0 : index
    %c0_43 = arith.constant 0 : index
    %158 = vector.load %arg7[%c0_42, %c0_43] : memref<8x32xf32, #tpu.memory_space<vmem>>, vector<8x32xf32>
    %c0_44 = arith.constant 0 : index
    %c0_45 = arith.constant 0 : index
    %159 = vector.load %arg3[%c0_44, %c0_45] : memref<32x32xf32, #tpu.memory_space<vmem>>, vector<32x32xf32>
    %cst_46 = arith.constant dense<0.000000e+00> : vector<8x32xf32>
    %160 = tpu.matmul %158, %159, %cst_46 {dimension_numbers = #tpu.dot_dimension_numbers<[1], [0], [0], [1], [0, 0, 1, 1], [], []>} : vector<8x32xf32>, vector<32x32xf32>, vector<8x32xf32> -> vector<8x32xf32>
    %c0_47 = arith.constant 0 : index
    %c0_48 = arith.constant 0 : index
    %161 = vector.load %arg4[%c0_47, %c0_48] : memref<1x32xf32, #tpu.memory_space<vmem>>, vector<1x32xf32>
    %162 = vector.broadcast %161 : vector<1x32xf32> to vector<8x32xf32>
    %163 = arith.addf %160, %162 : vector<8x32xf32>
    %c0_49 = arith.constant 0 : index
    %c0_50 = arith.constant 0 : index
    %164 = vector.load %arg5[%c0_49, %c0_50] : memref<8x32xf32, #tpu.memory_space<vmem>>, vector<8x32xf32>
    tpu.vector_store %arg5[%c0_49, %c0_50], %163 {strides = array<i32>} : memref<8x32xf32, #tpu.memory_space<vmem>>, vector<8x32xf32>,
    return
  }
  func.func @transform_0(%arg0: i32) -> (i32, i32) {
    %c0_i32 = arith.constant 0 : i32
    %c0_i32_0 = arith.constant 0 : i32
    return %arg0, %c0_i32 : i32, i32
  }
  func.func @transform_1(%arg0: i32) -> (i32, i32) {
    %c0_i32 = arith.constant 0 : i32
    %c0_i32_0 = arith.constant 0 : i32
    %c0_i32_1 = arith.constant 0 : i32
    return %c0_i32, %c0_i32_0 : i32, i32
  }
  func.func @transform_2(%arg0: i32) -> (i32, i32) {
    %c0_i32 = arith.constant 0 : i32
    %c0_i32_0 = arith.constant 0 : i32
    %c0_i32_1 = arith.constant 0 : i32
    return %c0_i32, %c0_i32_0 : i32, i32
  }
  func.func @transform_3(%arg0: i32) -> (i32, i32) {
    %c0_i32 = arith.constant 0 : i32
    %c0_i32_0 = arith.constant 0 : i32
    %c0_i32_1 = arith.constant 0 : i32
    return %c0_i32, %c0_i32_0 : i32, i32
  }
  func.func @transform_4(%arg0: i32) -> (i32, i32) {
    %c0_i32 = arith.constant 0 : i32
    %c0_i32_0 = arith.constant 0 : i32
    return %arg0, %c0_i32 : i32, i32
  }
}

</mosaic_0001>

<llo_original>
// kernel: tpu_custom_call.1
$region0: #{tpu_custom_call.1}
  #allocation0 [shape = 'u32[]', space=smem, size = 0x4, offset = 0x4, fixed_abs, tag = 'smem constant byte address 0x4 - core index']
  #allocation1 [shape = 'u32[144,128]{1,0:T(1,128)}', space=vmem, size = 0x12000, scoped, tag = 'internal scratch']
  #allocation2 [shape = 'f32[8,96]{1,0:T(8,128)}', space=vmem, size = 0x1000, scoped, tag = 'scratch operand']
  #allocation3 [shape = 'f32[8,32]{1,0:T(8,128)}', space=vmem, size = 0x1000, scoped, tag = 'scratch operand']
  %s0 = inlined_call_operand.hbm [shape: f32[16,32], index: 0, kind: input, shape index: {}]
  %s1 = inlined_call_operand.hbm [shape: f32[32,96], index: 1, kind: input, shape index: {}]
  %s2 = inlined_call_operand.hbm [shape: f32[32,32], index: 2, kind: input, shape index: {}]
  %s3 = inlined_call_operand.vmem [shape: f32[1,32], index: 3, kind: input, shape index: {}]
  %s4 = inlined_call_operand.hbm [shape: f32[16,32], index: 4, kind: output, shape index: {}]
  %s5 = sld [smem:[#allocation0]]
  $region61: #{tpu_custom_call.1} parent=0
    _
  %s7 = ssub.s32 1, %s5
  %s8 = scalar_select 0, %s7, %s5
  $region1: #{tpu_custom_call.1} parent=0
    #allocation4 [shape = 'u8[8192]{0}', space=vmem, size = 0x2000, scoped, tag = 'input window, operand 0']
    #allocation5 [shape = 's32[2]{0}', space=sflag, size = 0x8, scoped, tag = 'scoped memory for tpu_custom_call.1']
    #allocation6 [shape = 's32[2]{0}', space=sflag, size = 0x8, scoped, tag = 'scoped memory for tpu_custom_call.1']
    #allocation7 [shape = 'u8[16384]{0}', space=vmem, size = 0x4000, scoped, tag = 'input window, operand 1, single buffered']
    #allocation8 [shape = 's32[1]{0}', space=sflag, size = 0x4, scoped, tag = 'scoped memory for tpu_custom_call.1']
    #allocation9 [shape = 'u8[16384]{0}', space=vmem, size = 0x4000, scoped, tag = 'input window, operand 2, single buffered']
    #allocation10 [shape = 'u8[8192]{0}', space=vmem, size = 0x2000, scoped, tag = 'output window, operand 0']
    %9 = vsyncpa [#allocation5], 0
    %s10 = scalar_lea.sflag [#allocation5], 1
    %11 = vsyncpa %s10, 0
    %12 = vsyncpa [#allocation8], 0
    %13 = vsyncpa [#allocation6], 0
    %s14 = scalar_lea.sflag [#allocation6], 1
    %15 = vsyncpa %s14, 0
    loop: start=0, step=1, limit=4
    $region2: #{tpu_custom_call.1} parent=1 // loop_pre_header
      _
    $region3: #{tpu_custom_call.1} parent=1 // loop_header
      %s17 = sphi 0, %s21
      %p18 = scmp.ge.s32.totalorder %s17, 4
      %s27 = sphi 0, %s29
      %s30 = sphi 0, %s27
      %s31 = sphi 0, %s30
      %s47 = sphi 0, %s31
      %s51 = sphi 0, %s51
      %s53 = sphi 0, %s51
      %s54 = sphi 0, %s53
      %s68 = sphi 0, %s54
      %s72 = sphi 0, %s72
      %s74 = sphi 0, %s72
      %s75 = sphi 0, %s74
      %s89 = sphi 0, %s75
      %s93 = sphi 0, %s93
      %s95 = sphi 0, %s93
      %s96 = sphi 0, %s95
      %s110 = sphi 0, %s96
      %s116 = sphi 0, %s118
      %s119 = sphi 0, %s116
      %s120 = sphi 0, %s119
      %s136 = sphi 0, %s120
    $region4: #{tpu_custom_call.1} parent=1 // loop_header_branch
      %20 = sbr.rel (%p18) target = $region8
    $region5: #{tpu_custom_call.1} parent=1 // loop_body
      %s22 = ssub.s32 %s17, 1
      %s23 = ssub.s32 %s17, 2
      %s24 = sadd.s32 %s17, 1
      %s25 = ssub.s32 %s17, %s24
      %p26 = scmp.eq.s32.totalorder %s25, 0
      %s28 = sadd.s32 %s27, 1
      %s29 = scalar_select %p26, %s27, %s28
      %p32 = pneg %p26
      %p33 = scmp.eq.s32.totalorder %s17, 1
      %p34 = por %p32, %p33
      %p35 = scmp.ne.s32.totalorder %s27, %s30
      %p36 = scmp.eq.s32.totalorder %s17, 0
      %p37 = por %p35, %p36
      %p38 = scmp.ne.s32.totalorder %s27, %s30
      %p39 = scmp.eq.s32.totalorder %s22, 1
      %p40 = por %p38, %p39
      %p41 = scmp.ne.s32.totalorder %s30, %s31
      %p42 = scmp.eq.s32.totalorder %s22, 0
      %p43 = por %p41, %p42
      %p44 = scmp.ne.s32.totalorder %s30, %s31
      %p45 = scmp.eq.s32.totalorder %s23, 1
      %p46 = por %p44, %p45
      %p48 = scmp.ne.s32.totalorder %s31, %s47
      %p49 = scmp.eq.s32.totalorder %s23, 0
      %p50 = por %p48, %p49
      %s52 = sadd.s32 %s51, 1
      %p55 = scmp.eq.s32.totalorder %s17, 1
      %p56 = scmp.ne.s32.totalorder %s51, %s53
      %p57 = scmp.eq.s32.totalorder %s17, 0
      %p58 = por %p56, %p57
      %p59 = scmp.ne.s32.totalorder %s51, %s53
      %p60 = scmp.eq.s32.totalorder %s22, 1
      %p61 = por %p59, %p60
      %p62 = scmp.ne.s32.totalorder %s53, %s54
      %p63 = scmp.eq.s32.totalorder %s22, 0
      %p64 = por %p62, %p63
      %p65 = scmp.ne.s32.totalorder %s53, %s54
      %p66 = scmp.eq.s32.totalorder %s23, 1
      %p67 = por %p65, %p66
      %p69 = scmp.ne.s32.totalorder %s54, %s68
      %p70 = scmp.eq.s32.totalorder %s23, 0
      %p71 = por %p69, %p70
      %s73 = sadd.s32 %s72, 1
      %p76 = scmp.eq.s32.totalorder %s17, 1
      %p77 = scmp.ne.s32.totalorder %s72, %s74
      %p78 = scmp.eq.s32.totalorder %s17, 0
      %p79 = por %p77, %p78
      %p80 = scmp.ne.s32.totalorder %s72, %s74
      %p81 = scmp.eq.s32.totalorder %s22, 1
      %p82 = por %p80, %p81
      %p83 = scmp.ne.s32.totalorder %s74, %s75
      %p84 = scmp.eq.s32.totalorder %s22, 0
      %p85 = por %p83, %p84
      %p86 = scmp.ne.s32.totalorder %s74, %s75
      %p87 = scmp.eq.s32.totalorder %s23, 1
      %p88 = por %p86, %p87
      %p90 = scmp.ne.s32.totalorder %s75, %s89
      %p91 = scmp.eq.s32.totalorder %s23, 0
      %p92 = por %p90, %p91
      %s94 = sadd.s32 %s93, 1
      %p97 = scmp.eq.s32.totalorder %s17, 1
      %p98 = scmp.ne.s32.totalorder %s93, %s95
      %p99 = scmp.eq.s32.totalorder %s17, 0
      %p100 = por %p98, %p99
      %p101 = scmp.ne.s32.totalorder %s93, %s95
      %p102 = scmp.eq.s32.totalorder %s22, 1
      %p103 = por %p101, %p102
      %p104 = scmp.ne.s32.totalorder %s95, %s96
      %p105 = scmp.eq.s32.totalorder %s22, 0
      %p106 = por %p104, %p105
      %p107 = scmp.ne.s32.totalorder %s95, %s96
      %p108 = scmp.eq.s32.totalorder %s23, 1
      %p109 = por %p107, %p108
      %p111 = scmp.ne.s32.totalorder %s96, %s110
      %p112 = scmp.eq.s32.totalorder %s23, 0
      %p113 = por %p111, %p112
      %s114 = ssub.s32 %s17, %s24
      %p115 = scmp.eq.s32.totalorder %s114, 0
      %s117 = sadd.s32 %s116, 1
      %s118 = scalar_select %p115, %s116, %s117
      %p121 = pneg %p115
      %p122 = scmp.eq.s32.totalorder %s17, 1
      %p123 = por %p121, %p122
      %p124 = scmp.ne.s32.totalorder %s116, %s119
      %p125 = scmp.eq.s32.totalorder %s17, 0
      %p126 = por %p124, %p125
      %p127 = scmp.ne.s32.totalorder %s116, %s119
      %p128 = scmp.eq.s32.totalorder %s22, 1
      %p129 = por %p127, %p128
      %p130 = scmp.ne.s32.totalorder %s119, %s120
      %p131 = scmp.eq.s32.totalorder %s22, 0
      %p132 = por %p130, %p131
      %p133 = scmp.ne.s32.totalorder %s119, %s120
      %p134 = scmp.eq.s32.totalorder %s23, 1
      %p135 = por %p133, %p134
      %p137 = scmp.ne.s32.totalorder %s120, %s136
      %p138 = scmp.eq.s32.totalorder %s23, 0
      %p139 = por %p137, %p138
      %p140 = scmp.le.s32.totalorder 1, %s17
      %p141 = scmp.lt.s32.totalorder %s17, 3
      %p142 = pnand %p140, %p141
      %p143 = pneg %p142
      // Predicated region
      $region9: #{tpu_custom_call.1} parent=5 // pred_check
        _
      $region10: #{tpu_custom_call.1} parent=5 // pred_check_branch
        %145 = sbr.rel (%p142) target = $region12
      $region11: #{tpu_custom_call.1} parent=5 // pred_region
        %s146 = ssub.s32 %s17, 1
        // Predicated region
        $region13: #{tpu_custom_call.1} parent=11 // pred_check
          %p147 = pneg %p64
        $region14: #{tpu_custom_call.1} parent=11 // pred_check_branch
          %149 = sbr.rel (%p147) target = $region16
        $region15: #{tpu_custom_call.1} parent=11 // pred_region
          %s151 = ssub.s32 512, 512
          %152 = vsyncadd [#allocation8], %s151
          %s153 = sshll.u32 [#allocation7], 4
          %s154 = int_to_ptr.vmem [resolvable:$true] %s153
          %159 = dma.hbm_to_vmem [thread:$0]  %s1, 512, %s154, [#allocation8], 128, 128, 8
        $region16: #{tpu_custom_call.1} parent=11 // pred_fallthru
          _
        // Predicated region
        $region17: #{tpu_custom_call.1} parent=11 // pred_check
          %p160 = pneg %p85
        $region18: #{tpu_custom_call.1} parent=11 // pred_check_branch
          %162 = sbr.rel (%p160) target = $region20
        $region19: #{tpu_custom_call.1} parent=11 // pred_region
          %s164 = ssub.s32 512, 512
          %165 = vsyncadd [#allocation8], %s164
          %s166 = sshll.u32 [#allocation9], 4
          %s167 = int_to_ptr.vmem [resolvable:$true] %s166
          %172 = dma.hbm_to_vmem [thread:$0]  %s2, 512, %s167, [#allocation8], 128, 128, 8
        $region20: #{tpu_custom_call.1} parent=11 // pred_fallthru
          _
        // Predicated region
        $region21: #{tpu_custom_call.1} parent=11 // pred_check
          %p173 = pneg %p106
        $region22: #{tpu_custom_call.1} parent=11 // pred_check_branch
          %175 = sbr.rel (%p173) target = $region24
        $region23: #{tpu_custom_call.1} parent=11 // pred_region
          _
        $region24: #{tpu_custom_call.1} parent=11 // pred_fallthru
          _
      $region12: #{tpu_custom_call.1} parent=5 // pred_fallthru
        _
      %p176 = scmp.lt.s32.totalorder %s17, 2
      // Predicated region
      $region25: #{tpu_custom_call.1} parent=5 // pred_check
        %p177 = pneg %p176
      $region26: #{tpu_custom_call.1} parent=5 // pred_check_branch
        %179 = sbr.rel (%p177) target = $region28
      $region27: #{tpu_custom_call.1} parent=5 // pred_region
        // Predicated region
        $region29: #{tpu_custom_call.1} parent=27 // pred_check
          %p180 = pneg %p37
        $region30: #{tpu_custom_call.1} parent=27 // pred_check_branch
          %182 = sbr.rel (%p180) target = $region32
        $region31: #{tpu_custom_call.1} parent=27 // pred_region
          %s183 = sand.u32 %s27, 1
          %s184 = scalar_lea.sflag [#allocation5], %s183
          %s185 = sand.u32 %s27, 1
          %s186 = smul.addr %s185, 8
          %s187 = scalar_lea.vmem [#allocation4], %s186
          %s189 = ssub.s32 128, 128
          %190 = vsyncadd %s184, %s189
          %s191 = smul.addr %s17, 128
          %s192 = scalar_lea.hbm %s0, %s191
          %s194 = sshll.u32 %s187, 4
          %s195 = int_to_ptr.vmem [resolvable:$true] %s194
          %197 = dma.hbm_to_vmem [thread:$0]  %s192, 128, %s195, %s184
        $region32: #{tpu_custom_call.1} parent=27 // pred_fallthru
          _
      $region28: #{tpu_custom_call.1} parent=5 // pred_fallthru
        _
      %p198 = scmp.le.s32.totalorder 1, %s17
      %p199 = scmp.lt.s32.totalorder %s17, 3
      %p200 = pnand %p198, %p199
      %p201 = pneg %p200
      // Predicated region
      $region33: #{tpu_custom_call.1} parent=5 // pred_check
        _
      $region34: #{tpu_custom_call.1} parent=5 // pred_check_branch
        %203 = sbr.rel (%p200) target = $region36
      $region35: #{tpu_custom_call.1} parent=5 // pred_region
        %s204 = ssub.s32 %s17, 1
        %s205 = sand.u32 %s30, 1
        %s206 = scalar_lea.sflag [#allocation5], %s205
        %s207 = sand.u32 %s30, 1
        %s208 = smul.addr %s207, 8
        %s209 = scalar_lea.vmem [#allocation4], %s208
        // Predicated region
        $region37: #{tpu_custom_call.1} parent=35 // pred_check
          %p210 = pneg %p43
        $region38: #{tpu_custom_call.1} parent=35 // pred_check_branch
          %212 = sbr.rel (%p210) target = $region40
        $region39: #{tpu_custom_call.1} parent=35 // pred_region
          %213 = dma.done %s206, 128
        $region40: #{tpu_custom_call.1} parent=35 // pred_fallthru
          _
        // Predicated region
        $region41: #{tpu_custom_call.1} parent=35 // pred_check
          %p214 = pneg %p64
        $region42: #{tpu_custom_call.1} parent=35 // pred_check_branch
          %216 = sbr.rel (%p214) target = $region44
        $region43: #{tpu_custom_call.1} parent=35 // pred_region
          %217 = dma.done [#allocation8], 512
        $region44: #{tpu_custom_call.1} parent=35 // pred_fallthru
          _
        // Predicated region
        $region45: #{tpu_custom_call.1} parent=35 // pred_check
          %p218 = pneg %p85
        $region46: #{tpu_custom_call.1} parent=35 // pred_check_branch
          %220 = sbr.rel (%p218) target = $region48
        $region47: #{tpu_custom_call.1} parent=35 // pred_region
          %221 = dma.done [#allocation8], 512
        $region48: #{tpu_custom_call.1} parent=35 // pred_fallthru
          _
        %s222 = sand.u32 %s30, 1
        %s223 = scalar_lea.sflag [#allocation5], %s222
        %s224 = sand.u32 %s30, 1
        %s225 = smul.addr %s224, 8
        %s226 = scalar_lea.vmem [#allocation4], %s225
        %p227 = pneg %p43
        %p228 = pneg %p40
        %p229 = pneg %p64
        %p230 = pneg %p61
        %p231 = pneg %p85
        %p232 = pneg %p82
        %p233 = pneg %p106
        %p234 = pneg %p103
        %p235 = pneg %p132
        %p236 = pneg %p129
        %s237 = sand.u32 %s119, 1
        %s238 = scalar_lea.sflag [#allocation6], %s237
        %s239 = sand.u32 %s119, 1
        %s240 = smul.addr %s239, 8
        %s241 = scalar_lea.vmem [#allocation10], %s240
        %v242 = vld [vmem:[%s209] sm:$0xff]
        %v243 = vld [vmem:[#allocation7] sm:$0xff]
        %v244 = vld [vmem:[#allocation7 + $0x8] sm:$0xff]
        %v245 = vld [vmem:[#allocation7 + $0x10] sm:$0xff]
        %v246 = vld [vmem:[#allocation7 + $0x18] sm:$0xff]
        %vm247 = vcmask 261120
        %v249 = vsel %vm247, %v242, 0
        %251 = vmatprep.subr.mxu0 0.0
        %252 = vmatpush1.msra.mxu0 %v243
        %253 = vmatprep.subr.mxu0 0.0
        %254 = vmatpush1.msra.mxu0 %v244
        %255 = vmatprep.subr.mxu0 0.0
        %256 = vmatpush1.msra.mxu0 %v245
        %257 = vmatprep.subr.mxu0 0.0
        %258 = vmatpush1.msra.mxu0 %v246
        %259 = vmatprep.subr.mxu0 0.0
        %260 = vmatpush1.msra.mxu0 0.0
        %261 = vmatprep.subr.mxu0 0.0
        %262 = vmatpush1.msra.mxu0 0.0
        %263 = vmatprep.subr.mxu0 0.0
        %264 = vmatpush1.msra.mxu0 0.0
        %265 = vmatprep.subr.mxu0 0.0
        %266 = vmatpush1.msra.mxu0 0.0
        %267 = vmatprep.subr.mxu0 0.0
        %268 = vmatpush1.msra.mxu0 0.0
        %269 = vmatprep.subr.mxu0 0.0
        %270 = vmatpush1.msra.mxu0 0.0
        %271 = vmatprep.subr.mxu0 0.0
        %272 = vmatpush1.msra.mxu0 0.0
        %273 = vmatprep.subr.mxu0 0.0
        %274 = vmatpush1.msra.mxu0 0.0
        %275 = vmatprep.subr.mxu0 0.0
        %276 = vmatpush1.msra.mxu0 0.0
        %277 = vmatprep.subr.mxu0 0.0
        %278 = vmatpush1.msra.mxu0 0.0
        %279 = vmatprep.subr.mxu0 0.0
        %280 = vmatpush1.msra.mxu0 0.0
        %281 = vmatprep.subr.mxu0 0.0
        %282 = vmatpush1.msra.mxu0 0.0
        %283 = vmatprep.subr.mxu0 0.0
        %284 = vmatpush1.msra.mxu0 0.0
        %285 = vmatprep.subr.mxu0 0.0
        %286 = vmatpush1.msra.mxu0 0.0
        %287 = vmatprep.subr.mxu0 0.0
        %288 = vmatpush1.msra.mxu0 0.0
        %289 = vmatprep.subr.mxu0 0.0
        %290 = vmatpush1.msra.mxu0 0.0
        %291 = vmatprep.subr.mxu0 0.0
        %292 = vmatpush1.msra.mxu0 0.0
        %293 = vmatprep.subr.mxu0 0.0
        %294 = vmatpush1.msra.mxu0 0.0
        %295 = vmatprep.subr.mxu0 0.0
        %296 = vmatpush1.msra.mxu0 0.0
        %297 = vmatprep.subr.mxu0 0.0
        %298 = vmatpush1.msra.mxu0 0.0
        %299 = vmatprep.subr.mxu0 0.0
        %300 = vmatpush1.msra.mxu0 0.0
        %301 = vmatprep.subr.mxu0 0.0
        %302 = vmatpush1.msra.mxu0 0.0
        %303 = vmatprep.subr.mxu0 0.0
        %304 = vmatpush1.msra.mxu0 0.0
        %305 = vmatprep.subr.mxu0 0.0
        %306 = vmatpush1.msra.mxu0 0.0
        %307 = vmatprep.subr.mxu0 0.0
        %308 = vmatpush1.msra.mxu0 0.0
        %309 = vmatprep.subr.mxu0 0.0
        %310 = vmatpush1.msra.mxu0 0.0
        %311 = vmatprep.subr.mxu0 0.0
        %312 = vmatpush1.msra.mxu0 0.0
        %313 = vmatprep.subr.mxu0 0.0
        %314 = vmatpush1.msra.mxu0 0.0
        %315 = vmatprep.mubr.f32.mxu0 0.0
        %316 = vmatmul.mubr.f32.gmra.mrb[0].mxu0 %v249
        %v317 = vpop.f32.mrb[0].mxu0
        %v318 = vadd.f32 0.0, %v317
        %v319 = vpop.f32.mrb[0].mxu0
        %320 = vdwg.mxu0
        %v321 = vmul.f32 %v318, 0.5
        %322 = vst.msk [vmem:[#allocation2] sm:$0xff] %vm247, %v321
        %vm323 = vcmask 785664
        %324 = vst.msk [vmem:[#allocation2] sm:$0xff] %vm323, %v318
        %v325 = vld [vmem:[#allocation2] sm:$0xff]
        %327 = vrot.lane.b32.xlu0 %v325, 96
        %v328 = vpop.permute.xlu0 %327
        %vm329 = vcmask 31744
        %v330 = vsel %vm329, %v325, 0
        %v332 = vsel %vm329, %v328, 0
        %334 = vmatprep.subr.mxu0 0.0
        %335 = vmatpush1.xpose.msra.mxu0 %v332
        %336 = vmatprep.subr.mxu0 0.0
        %337 = vmatpush1.xpose.msra.mxu0 0.0
        %338 = vmatprep.subr.mxu0 0.0
        %339 = vmatpush1.xpose.msra.mxu0 0.0
        %340 = vmatprep.subr.mxu0 0.0
        %341 = vmatpush1.xpose.msra.mxu0 0.0
        %342 = vmatprep.subr.mxu0 0.0
        %343 = vmatpush1.xpose.msra.mxu0 0.0
        %344 = vmatprep.subr.mxu0 0.0
        %345 = vmatpush1.xpose.msra.mxu0 0.0
        %346 = vmatprep.subr.mxu0 0.0
        %347 = vmatpush1.xpose.msra.mxu0 0.0
        %348 = vmatprep.subr.mxu0 0.0
        %349 = vmatpush1.xpose.msra.mxu0 0.0
        %350 = vmatprep.subr.mxu0 0.0
        %351 = vmatpush1.xpose.msra.mxu0 0.0
        %352 = vmatprep.subr.mxu0 0.0
        %353 = vmatpush1.xpose.msra.mxu0 0.0
        %354 = vmatprep.subr.mxu0 0.0
        %355 = vmatpush1.xpose.msra.mxu0 0.0
        %356 = vmatprep.subr.mxu0 0.0
        %357 = vmatpush1.xpose.msra.mxu0 0.0
        %358 = vmatprep.subr.mxu0 0.0
        %359 = vmatpush1.xpose.msra.mxu0 0.0
        %360 = vmatprep.subr.mxu0 0.0
        %361 = vmatpush1.xpose.msra.mxu0 0.0
        %362 = vmatprep.subr.mxu0 0.0
        %363 = vmatpush1.xpose.msra.mxu0 0.0
        %364 = vmatprep.subr.mxu0 0.0
        %365 = vmatpush1.xpose.msra.mxu0 0.0
        %366 = vmatprep.subr.mxu0 0.0
        %367 = vmatpush1.xpose.msra.mxu0 0.0
        %368 = vmatprep.subr.mxu0 0.0
        %369 = vmatpush1.xpose.msra.mxu0 0.0
        %370 = vmatprep.subr.mxu0 0.0
        %371 = vmatpush1.xpose.msra.mxu0 0.0
        %372 = vmatprep.subr.mxu0 0.0
        %373 = vmatpush1.xpose.msra.mxu0 0.0
        %374 = vmatprep.subr.mxu0 0.0
        %375 = vmatpush1.xpose.msra.mxu0 0.0
        %376 = vmatprep.subr.mxu0 0.0
        %377 = vmatpush1.xpose.msra.mxu0 0.0
        %378 = vmatprep.subr.mxu0 0.0
        %379 = vmatpush1.xpose.msra.mxu0 0.0
        %380 = vmatprep.subr.mxu0 0.0
        %381 = vmatpush1.xpose.msra.mxu0 0.0
        %382 = vmatprep.subr.mxu0 0.0
        %383 = vmatpush1.xpose.msra.mxu0 0.0
        %384 = vmatprep.subr.mxu0 0.0
        %385 = vmatpush1.xpose.msra.mxu0 0.0
        %386 = vmatprep.subr.mxu0 0.0
        %387 = vmatpush1.xpose.msra.mxu0 0.0
        %388 = vmatprep.subr.mxu0 0.0
        %389 = vmatpush1.xpose.msra.mxu0 0.0
        %390 = vmatprep.subr.mxu0 0.0
        %391 = vmatpush1.xpose.msra.mxu0 0.0
        %392 = vmatprep.subr.mxu0 0.0
        %393 = vmatpush1.xpose.msra.mxu0 0.0
        %394 = vmatprep.subr.mxu0 0.0
        %395 = vmatpush1.xpose.msra.mxu0 0.0
        %396 = vmatprep.subr.mxu0 0.0
        %397 = vmatpush1.xpose.msra.mxu0 0.0
        %398 = vmatprep.mubr.f32.mxu0 0.0
        %399 = vmatmul.mubr.f32.gmra.mrb[0].mxu0 %v330
        %v400 = vpop.f32.mrb[0].mxu0
        %v401 = vadd.f32 0.0, %v400
        %v402 = vpop.f32.mrb[0].mxu0
        %403 = vdwg.mxu0
        %vm404 = vcmask 64512
        %v405 = vsel %vm404, %v401, -inf
        %406 = vmax.xlane.f32.xlu0 %v405
        %v407 = vpop.xlane.xlu0 %406
        %v408 = vsub.f32 %v401, %v407
        %v409 = vmul.f32 %v408, 1.442695
        %v410 = vpow.pop %v409
        %v411 = vsel %vm404, %v410, 0.0
        %412 = vadd.xlane.f32.xlu0 %v411
        %v413 = vpop.xlane.xlu0 %412
        %414 = vrot.lane.b32.xlu0 %v325, 64
        %v415 = vpop.permute.xlu0 %414
        %v418 = vsel %vm404, %v410, 0
        %420 = vmatprep.subr.mxu0 0.0
        %421 = vmatpush1.msra.mxu0 %v415
        %422 = vmatprep.subr.mxu0 0.0
        %423 = vmatpush1.msra.mxu0 0.0
        %424 = vmatprep.subr.mxu0 0.0
        %425 = vmatpush1.msra.mxu0 0.0
        %426 = vmatprep.subr.mxu0 0.0
        %427 = vmatpush1.msra.mxu0 0.0
        %428 = vmatprep.subr.mxu0 0.0
        %429 = vmatpush1.msra.mxu0 0.0
        %430 = vmatprep.subr.mxu0 0.0
        %431 = vmatpush1.msra.mxu0 0.0
        %432 = vmatprep.subr.mxu0 0.0
        %433 = vmatpush1.msra.mxu0 0.0
        %434 = vmatprep.subr.mxu0 0.0
        %435 = vmatpush1.msra.mxu0 0.0
        %436 = vmatprep.subr.mxu0 0.0
        %437 = vmatpush1.msra.mxu0 0.0
        %438 = vmatprep.subr.mxu0 0.0
        %439 = vmatpush1.msra.mxu0 0.0
        %440 = vmatprep.subr.mxu0 0.0
        %441 = vmatpush1.msra.mxu0 0.0
        %442 = vmatprep.subr.mxu0 0.0
        %443 = vmatpush1.msra.mxu0 0.0
        %444 = vmatprep.subr.mxu0 0.0
        %445 = vmatpush1.msra.mxu0 0.0
        %446 = vmatprep.subr.mxu0 0.0
        %447 = vmatpush1.msra.mxu0 0.0
        %448 = vmatprep.subr.mxu0 0.0
        %449 = vmatpush1.msra.mxu0 0.0
        %450 = vmatprep.subr.mxu0 0.0
        %451 = vmatpush1.msra.mxu0 0.0
        %452 = vmatprep.subr.mxu0 0.0
        %453 = vmatpush1.msra.mxu0 0.0
        %454 = vmatprep.subr.mxu0 0.0
        %455 = vmatpush1.msra.mxu0 0.0
        %456 = vmatprep.subr.mxu0 0.0
        %457 = vmatpush1.msra.mxu0 0.0
        %458 = vmatprep.subr.mxu0 0.0
        %459 = vmatpush1.msra.mxu0 0.0
        %460 = vmatprep.subr.mxu0 0.0
        %461 = vmatpush1.msra.mxu0 0.0
        %462 = vmatprep.subr.mxu0 0.0
        %463 = vmatpush1.msra.mxu0 0.0
        %464 = vmatprep.subr.mxu0 0.0
        %465 = vmatpush1.msra.mxu0 0.0
        %466 = vmatprep.subr.mxu0 0.0
        %467 = vmatpush1.msra.mxu0 0.0
        %468 = vmatprep.subr.mxu0 0.0
        %469 = vmatpush1.msra.mxu0 0.0
        %470 = vmatprep.subr.mxu0 0.0
        %471 = vmatpush1.msra.mxu0 0.0
        %472 = vmatprep.subr.mxu0 0.0
        %473 = vmatpush1.msra.mxu0 0.0
        %474 = vmatprep.subr.mxu0 0.0
        %475 = vmatpush1.msra.mxu0 0.0
        %476 = vmatprep.subr.mxu0 0.0
        %477 = vmatpush1.msra.mxu0 0.0
        %478 = vmatprep.subr.mxu0 0.0
        %479 = vmatpush1.msra.mxu0 0.0
        %480 = vmatprep.subr.mxu0 0.0
        %481 = vmatpush1.msra.mxu0 0.0
        %482 = vmatprep.subr.mxu0 0.0
        %483 = vmatpush1.msra.mxu0 0.0
        %484 = vmatprep.mubr.f32.mxu0 0.0
        %485 = vmatmul.mubr.f32.gmra.mrb[0].mxu0 %v418
        %v486 = vpop.f32.mrb[0].mxu0
        %v487 = vadd.f32 0.0, %v486
        %v488 = vpop.f32.mrb[0].mxu0
        %489 = vdwg.mxu0
        %v490 = vrcp.pop %v413
        %v491 = vmul.f32 %v487, %v490
        %492 = vrot.lane.b32.xlu0 %v325, 124
        %v493 = vpop.permute.xlu0 %492
        %494 = vrot.lane.b32.xlu0 %v325, 92
        %v495 = vpop.permute.xlu0 %494
        %v496 = vsel %vm329, %v493, 0
        %v498 = vsel %vm329, %v495, 0
        %500 = vmatprep.subr.mxu0 0.0
        %501 = vmatpush1.xpose.msra.mxu0 %v498
        %502 = vmatprep.subr.mxu0 0.0
        %503 = vmatpush1.xpose.msra.mxu0 0.0
        %504 = vmatprep.subr.mxu0 0.0
        %505 = vmatpush1.xpose.msra.mxu0 0.0
        %506 = vmatprep.subr.mxu0 0.0
        %507 = vmatpush1.xpose.msra.mxu0 0.0
        %508 = vmatprep.subr.mxu0 0.0
        %509 = vmatpush1.xpose.msra.mxu0 0.0
        %510 = vmatprep.subr.mxu0 0.0
        %511 = vmatpush1.xpose.msra.mxu0 0.0
        %512 = vmatprep.subr.mxu0 0.0
        %513 = vmatpush1.xpose.msra.mxu0 0.0
        %514 = vmatprep.subr.mxu0 0.0
        %515 = vmatpush1.xpose.msra.mxu0 0.0
        %516 = vmatprep.subr.mxu0 0.0
        %517 = vmatpush1.xpose.msra.mxu0 0.0
        %518 = vmatprep.subr.mxu0 0.0
        %519 = vmatpush1.xpose.msra.mxu0 0.0
        %520 = vmatprep.subr.mxu0 0.0
        %521 = vmatpush1.xpose.msra.mxu0 0.0
        %522 = vmatprep.subr.mxu0 0.0
        %523 = vmatpush1.xpose.msra.mxu0 0.0
        %524 = vmatprep.subr.mxu0 0.0
        %525 = vmatpush1.xpose.msra.mxu0 0.0
        %526 = vmatprep.subr.mxu0 0.0
        %527 = vmatpush1.xpose.msra.mxu0 0.0
        %528 = vmatprep.subr.mxu0 0.0
        %529 = vmatpush1.xpose.msra.mxu0 0.0
        %530 = vmatprep.subr.mxu0 0.0
        %531 = vmatpush1.xpose.msra.mxu0 0.0
        %532 = vmatprep.subr.mxu0 0.0
        %533 = vmatpush1.xpose.msra.mxu0 0.0
        %534 = vmatprep.subr.mxu0 0.0
        %535 = vmatpush1.xpose.msra.mxu0 0.0
        %536 = vmatprep.subr.mxu0 0.0
        %537 = vmatpush1.xpose.msra.mxu0 0.0
        %538 = vmatprep.subr.mxu0 0.0
        %539 = vmatpush1.xpose.msra.mxu0 0.0
        %540 = vmatprep.subr.mxu0 0.0
        %541 = vmatpush1.xpose.msra.mxu0 0.0
        %542 = vmatprep.subr.mxu0 0.0
        %543 = vmatpush1.xpose.msra.mxu0 0.0
        %544 = vmatprep.subr.mxu0 0.0
        %545 = vmatpush1.xpose.msra.mxu0 0.0
        %546 = vmatprep.subr.mxu0 0.0
        %547 = vmatpush1.xpose.msra.mxu0 0.0
        %548 = vmatprep.subr.mxu0 0.0
        %549 = vmatpush1.xpose.msra.mxu0 0.0
        %550 = vmatprep.subr.mxu0 0.0
        %551 = vmatpush1.xpose.msra.mxu0 0.0
        %552 = vmatprep.subr.mxu0 0.0
        %553 = vmatpush1.xpose.msra.mxu0 0.0
        %554 = vmatprep.subr.mxu0 0.0
        %555 = vmatpush1.xpose.msra.mxu0 0.0
        %556 = vmatprep.subr.mxu0 0.0
        %557 = vmatpush1.xpose.msra.mxu0 0.0
        %558 = vmatprep.subr.mxu0 0.0
        %559 = vmatpush1.xpose.msra.mxu0 0.0
        %560 = vmatprep.subr.mxu0 0.0
        %561 = vmatpush1.xpose.msra.mxu0 0.0
        %562 = vmatprep.subr.mxu0 0.0
        %563 = vmatpush1.xpose.msra.mxu0 0.0
        %564 = vmatprep.mubr.f32.mxu0 0.0
        %565 = vmatmul.mubr.f32.gmra.mrb[0].mxu0 %v496
        %v566 = vpop.f32.mrb[0].mxu0
        %v567 = vadd.f32 0.0, %v566
        %v568 = vpop.f32.mrb[0].mxu0
        %569 = vdwg.mxu0
        %v570 = vsel %vm404, %v567, -inf
        %571 = vmax.xlane.f32.xlu0 %v570
        %v572 = vpop.xlane.xlu0 %571
        %v573 = vsub.f32 %v567, %v572
        %v574 = vmul.f32 %v573, 1.442695
        %v575 = vpow.pop %v574
        %v576 = vsel %vm404, %v575, 0.0
        %577 = vadd.xlane.f32.xlu0 %v576
        %v578 = vpop.xlane.xlu0 %577
        %579 = vrot.lane.b32.xlu0 %v325, 60
        %v580 = vpop.permute.xlu0 %579
        %v583 = vsel %vm404, %v575, 0
        %585 = vmatprep.subr.mxu0 0.0
        %586 = vmatpush1.msra.mxu0 %v580
        %587 = vmatprep.subr.mxu0 0.0
        %588 = vmatpush1.msra.mxu0 0.0
        %589 = vmatprep.subr.mxu0 0.0
        %590 = vmatpush1.msra.mxu0 0.0
        %591 = vmatprep.subr.mxu0 0.0
        %592 = vmatpush1.msra.mxu0 0.0
        %593 = vmatprep.subr.mxu0 0.0
        %594 = vmatpush1.msra.mxu0 0.0
        %595 = vmatprep.subr.mxu0 0.0
        %596 = vmatpush1.msra.mxu0 0.0
        %597 = vmatprep.subr.mxu0 0.0
        %598 = vmatpush1.msra.mxu0 0.0
        %599 = vmatprep.subr.mxu0 0.0
        %600 = vmatpush1.msra.mxu0 0.0
        %601 = vmatprep.subr.mxu0 0.0
        %602 = vmatpush1.msra.mxu0 0.0
        %603 = vmatprep.subr.mxu0 0.0
        %604 = vmatpush1.msra.mxu0 0.0
        %605 = vmatprep.subr.mxu0 0.0
        %606 = vmatpush1.msra.mxu0 0.0
        %607 = vmatprep.subr.mxu0 0.0
        %608 = vmatpush1.msra.mxu0 0.0
        %609 = vmatprep.subr.mxu0 0.0
        %610 = vmatpush1.msra.mxu0 0.0
        %611 = vmatprep.subr.mxu0 0.0
        %612 = vmatpush1.msra.mxu0 0.0
        %613 = vmatprep.subr.mxu0 0.0
        %614 = vmatpush1.msra.mxu0 0.0
        %615 = vmatprep.subr.mxu0 0.0
        %616 = vmatpush1.msra.mxu0 0.0
        %617 = vmatprep.subr.mxu0 0.0
        %618 = vmatpush1.msra.mxu0 0.0
        %619 = vmatprep.subr.mxu0 0.0
        %620 = vmatpush1.msra.mxu0 0.0
        %621 = vmatprep.subr.mxu0 0.0
        %622 = vmatpush1.msra.mxu0 0.0
        %623 = vmatprep.subr.mxu0 0.0
        %624 = vmatpush1.msra.mxu0 0.0
        %625 = vmatprep.subr.mxu0 0.0
        %626 = vmatpush1.msra.mxu0 0.0
        %627 = vmatprep.subr.mxu0 0.0
        %628 = vmatpush1.msra.mxu0 0.0
        %629 = vmatprep.subr.mxu0 0.0
        %630 = vmatpush1.msra.mxu0 0.0
        %631 = vmatprep.subr.mxu0 0.0
        %632 = vmatpush1.msra.mxu0 0.0
        %633 = vmatprep.subr.mxu0 0.0
        %634 = vmatpush1.msra.mxu0 0.0
        %635 = vmatprep.subr.mxu0 0.0
        %636 = vmatpush1.msra.mxu0 0.0
        %637 = vmatprep.subr.mxu0 0.0
        %638 = vmatpush1.msra.mxu0 0.0
        %639 = vmatprep.subr.mxu0 0.0
        %640 = vmatpush1.msra.mxu0 0.0
        %641 = vmatprep.subr.mxu0 0.0
        %642 = vmatpush1.msra.mxu0 0.0
        %643 = vmatprep.subr.mxu0 0.0
        %644 = vmatpush1.msra.mxu0 0.0
        %645 = vmatprep.subr.mxu0 0.0
        %646 = vmatpush1.msra.mxu0 0.0
        %647 = vmatprep.subr.mxu0 0.0
        %648 = vmatpush1.msra.mxu0 0.0
        %649 = vmatprep.mubr.f32.mxu0 0.0
        %650 = vmatmul.mubr.f32.gmra.mrb[0].mxu0 %v583
        %v651 = vpop.f32.mrb[0].mxu0
        %v652 = vadd.f32 0.0, %v651
        %v653 = vpop.f32.mrb[0].mxu0
        %654 = vdwg.mxu0
        %v655 = vrcp.pop %v578
        %v656 = vmul.f32 %v652, %v655
        %657 = vrot.lane.b32.xlu0 %v325, 120
        %v658 = vpop.permute.xlu0 %657
        %659 = vrot.lane.b32.xlu0 %v325, 88
        %v660 = vpop.permute.xlu0 %659
        %v661 = vsel %vm329, %v658, 0
        %v663 = vsel %vm329, %v660, 0
        %665 = vmatprep.subr.mxu0 0.0
        %666 = vmatpush1.xpose.msra.mxu0 %v663
        %667 = vmatprep.subr.mxu0 0.0
        %668 = vmatpush1.xpose.msra.mxu0 0.0
        %669 = vmatprep.subr.mxu0 0.0
        %670 = vmatpush1.xpose.msra.mxu0 0.0
        %671 = vmatprep.subr.mxu0 0.0
        %672 = vmatpush1.xpose.msra.mxu0 0.0
        %673 = vmatprep.subr.mxu0 0.0
        %674 = vmatpush1.xpose.msra.mxu0 0.0
        %675 = vmatprep.subr.mxu0 0.0
        %676 = vmatpush1.xpose.msra.mxu0 0.0
        %677 = vmatprep.subr.mxu0 0.0
        %678 = vmatpush1.xpose.msra.mxu0 0.0
        %679 = vmatprep.subr.mxu0 0.0
        %680 = vmatpush1.xpose.msra.mxu0 0.0
        %681 = vmatprep.subr.mxu0 0.0
        %682 = vmatpush1.xpose.msra.mxu0 0.0
        %683 = vmatprep.subr.mxu0 0.0
        %684 = vmatpush1.xpose.msra.mxu0 0.0
        %685 = vmatprep.subr.mxu0 0.0
        %686 = vmatpush1.xpose.msra.mxu0 0.0
        %687 = vmatprep.subr.mxu0 0.0
        %688 = vmatpush1.xpose.msra.mxu0 0.0
        %689 = vmatprep.subr.mxu0 0.0
        %690 = vmatpush1.xpose.msra.mxu0 0.0
        %691 = vmatprep.subr.mxu0 0.0
        %692 = vmatpush1.xpose.msra.mxu0 0.0
        %693 = vmatprep.subr.mxu0 0.0
        %694 = vmatpush1.xpose.msra.mxu0 0.0
        %695 = vmatprep.subr.mxu0 0.0
        %696 = vmatpush1.xpose.msra.mxu0 0.0
        %697 = vmatprep.subr.mxu0 0.0
        %698 = vmatpush1.xpose.msra.mxu0 0.0
        %699 = vmatprep.subr.mxu0 0.0
        %700 = vmatpush1.xpose.msra.mxu0 0.0
        %701 = vmatprep.subr.mxu0 0.0
        %702 = vmatpush1.xpose.msra.mxu0 0.0
        %703 = vmatprep.subr.mxu0 0.0
        %704 = vmatpush1.xpose.msra.mxu0 0.0
        %705 = vmatprep.subr.mxu0 0.0
        %706 = vmatpush1.xpose.msra.mxu0 0.0
        %707 = vmatprep.subr.mxu0 0.0
        %708 = vmatpush1.xpose.msra.mxu0 0.0
        %709 = vmatprep.subr.mxu0 0.0
        %710 = vmatpush1.xpose.msra.mxu0 0.0
        %711 = vmatprep.subr.mxu0 0.0
        %712 = vmatpush1.xpose.msra.mxu0 0.0
        %713 = vmatprep.subr.mxu0 0.0
        %714 = vmatpush1.xpose.msra.mxu0 0.0
        %715 = vmatprep.subr.mxu0 0.0
        %716 = vmatpush1.xpose.msra.mxu0 0.0
        %717 = vmatprep.subr.mxu0 0.0
        %718 = vmatpush1.xpose.msra.mxu0 0.0
        %719 = vmatprep.subr.mxu0 0.0
        %720 = vmatpush1.xpose.msra.mxu0 0.0
        %721 = vmatprep.subr.mxu0 0.0
        %722 = vmatpush1.xpose.msra.mxu0 0.0
        %723 = vmatprep.subr.mxu0 0.0
        %724 = vmatpush1.xpose.msra.mxu0 0.0
        %725 = vmatprep.subr.mxu0 0.0
        %726 = vmatpush1.xpose.msra.mxu0 0.0
        %727 = vmatprep.subr.mxu0 0.0
        %728 = vmatpush1.xpose.msra.mxu0 0.0
        %729 = vmatprep.mubr.f32.mxu0 0.0
        %730 = vmatmul.mubr.f32.gmra.mrb[0].mxu0 %v661
        %v731 = vpop.f32.mrb[0].mxu0
        %v732 = vadd.f32 0.0, %v731
        %v733 = vpop.f32.mrb[0].mxu0
        %734 = vdwg.mxu0
        %v735 = vsel %vm404, %v732, -inf
        %736 = vmax.xlane.f32.xlu0 %v735
        %v737 = vpop.xlane.xlu0 %736
        %v738 = vsub.f32 %v732, %v737
        %v739 = vmul.f32 %v738, 1.442695
        %v740 = vpow.pop %v739
        %v741 = vsel %vm404, %v740, 0.0
        %742 = vadd.xlane.f32.xlu0 %v741
        %v743 = vpop.xlane.xlu0 %742
        %744 = vrot.lane.b32.xlu0 %v325, 56
        %v745 = vpop.permute.xlu0 %744
        %v748 = vsel %vm404, %v740, 0
        %750 = vmatprep.subr.mxu0 0.0
        %751 = vmatpush1.msra.mxu0 %v745
        %752 = vmatprep.subr.mxu0 0.0
        %753 = vmatpush1.msra.mxu0 0.0
        %754 = vmatprep.subr.mxu0 0.0
        %755 = vmatpush1.msra.mxu0 0.0
        %756 = vmatprep.subr.mxu0 0.0
        %757 = vmatpush1.msra.mxu0 0.0
        %758 = vmatprep.subr.mxu0 0.0
        %759 = vmatpush1.msra.mxu0 0.0
        %760 = vmatprep.subr.mxu0 0.0
        %761 = vmatpush1.msra.mxu0 0.0
        %762 = vmatprep.subr.mxu0 0.0
        %763 = vmatpush1.msra.mxu0 0.0
        %764 = vmatprep.subr.mxu0 0.0
        %765 = vmatpush1.msra.mxu0 0.0
        %766 = vmatprep.subr.mxu0 0.0
        %767 = vmatpush1.msra.mxu0 0.0
        %768 = vmatprep.subr.mxu0 0.0
        %769 = vmatpush1.msra.mxu0 0.0
        %770 = vmatprep.subr.mxu0 0.0
        %771 = vmatpush1.msra.mxu0 0.0
        %772 = vmatprep.subr.mxu0 0.0
        %773 = vmatpush1.msra.mxu0 0.0
        %774 = vmatprep.subr.mxu0 0.0
        %775 = vmatpush1.msra.mxu0 0.0
        %776 = vmatprep.subr.mxu0 0.0
        %777 = vmatpush1.msra.mxu0 0.0
        %778 = vmatprep.subr.mxu0 0.0
        %779 = vmatpush1.msra.mxu0 0.0
        %780 = vmatprep.subr.mxu0 0.0
        %781 = vmatpush1.msra.mxu0 0.0
        %782 = vmatprep.subr.mxu0 0.0
        %783 = vmatpush1.msra.mxu0 0.0
        %784 = vmatprep.subr.mxu0 0.0
        %785 = vmatpush1.msra.mxu0 0.0
        %786 = vmatprep.subr.mxu0 0.0
        %787 = vmatpush1.msra.mxu0 0.0
        %788 = vmatprep.subr.mxu0 0.0
        %789 = vmatpush1.msra.mxu0 0.0
        %790 = vmatprep.subr.mxu0 0.0
        %791 = vmatpush1.msra.mxu0 0.0
        %792 = vmatprep.subr.mxu0 0.0
        %793 = vmatpush1.msra.mxu0 0.0
        %794 = vmatprep.subr.mxu0 0.0
        %795 = vmatpush1.msra.mxu0 0.0
        %796 = vmatprep.subr.mxu0 0.0
        %797 = vmatpush1.msra.mxu0 0.0
        %798 = vmatprep.subr.mxu0 0.0
        %799 = vmatpush1.msra.mxu0 0.0
        %800 = vmatprep.subr.mxu0 0.0
        %801 = vmatpush1.msra.mxu0 0.0
        %802 = vmatprep.subr.mxu0 0.0
        %803 = vmatpush1.msra.mxu0 0.0
        %804 = vmatprep.subr.mxu0 0.0
        %805 = vmatpush1.msra.mxu0 0.0
        %806 = vmatprep.subr.mxu0 0.0
        %807 = vmatpush1.msra.mxu0 0.0
        %808 = vmatprep.subr.mxu0 0.0
        %809 = vmatpush1.msra.mxu0 0.0
        %810 = vmatprep.subr.mxu0 0.0
        %811 = vmatpush1.msra.mxu0 0.0
        %812 = vmatprep.subr.mxu0 0.0
        %813 = vmatpush1.msra.mxu0 0.0
        %814 = vmatprep.mubr.f32.mxu0 0.0
        %815 = vmatmul.mubr.f32.gmra.mrb[0].mxu0 %v748
        %v816 = vpop.f32.mrb[0].mxu0
        %v817 = vadd.f32 0.0, %v816
        %v818 = vpop.f32.mrb[0].mxu0
        %819 = vdwg.mxu0
        %v820 = vrcp.pop %v743
        %v821 = vmul.f32 %v817, %v820
        %822 = vrot.lane.b32.xlu0 %v325, 116
        %v823 = vpop.permute.xlu0 %822
        %824 = vrot.lane.b32.xlu0 %v325, 84
        %v825 = vpop.permute.xlu0 %824
        %v826 = vsel %vm329, %v823, 0
        %v828 = vsel %vm329, %v825, 0
        %830 = vmatprep.subr.mxu0 0.0
        %831 = vmatpush1.xpose.msra.mxu0 %v828
        %832 = vmatprep.subr.mxu0 0.0
        %833 = vmatpush1.xpose.msra.mxu0 0.0
        %834 = vmatprep.subr.mxu0 0.0
        %835 = vmatpush1.xpose.msra.mxu0 0.0
        %836 = vmatprep.subr.mxu0 0.0
        %837 = vmatpush1.xpose.msra.mxu0 0.0
        %838 = vmatprep.subr.mxu0 0.0
        %839 = vmatpush1.xpose.msra.mxu0 0.0
        %840 = vmatprep.subr.mxu0 0.0
        %841 = vmatpush1.xpose.msra.mxu0 0.0
        %842 = vmatprep.subr.mxu0 0.0
        %843 = vmatpush1.xpose.msra.mxu0 0.0
        %844 = vmatprep.subr.mxu0 0.0
        %845 = vmatpush1.xpose.msra.mxu0 0.0
        %846 = vmatprep.subr.mxu0 0.0
        %847 = vmatpush1.xpose.msra.mxu0 0.0
        %848 = vmatprep.subr.mxu0 0.0
        %849 = vmatpush1.xpose.msra.mxu0 0.0
        %850 = vmatprep.subr.mxu0 0.0
        %851 = vmatpush1.xpose.msra.mxu0 0.0
        %852 = vmatprep.subr.mxu0 0.0
        %853 = vmatpush1.xpose.msra.mxu0 0.0
        %854 = vmatprep.subr.mxu0 0.0
        %855 = vmatpush1.xpose.msra.mxu0 0.0
        %856 = vmatprep.subr.mxu0 0.0
        %857 = vmatpush1.xpose.msra.mxu0 0.0
        %858 = vmatprep.subr.mxu0 0.0
        %859 = vmatpush1.xpose.msra.mxu0 0.0
        %860 = vmatprep.subr.mxu0 0.0
        %861 = vmatpush1.xpose.msra.mxu0 0.0
        %862 = vmatprep.subr.mxu0 0.0
        %863 = vmatpush1.xpose.msra.mxu0 0.0
        %864 = vmatprep.subr.mxu0 0.0
        %865 = vmatpush1.xpose.msra.mxu0 0.0
        %866 = vmatprep.subr.mxu0 0.0
        %867 = vmatpush1.xpose.msra.mxu0 0.0
        %868 = vmatprep.subr.mxu0 0.0
        %869 = vmatpush1.xpose.msra.mxu0 0.0
        %870 = vmatprep.subr.mxu0 0.0
        %871 = vmatpush1.xpose.msra.mxu0 0.0
        %872 = vmatprep.subr.mxu0 0.0
        %873 = vmatpush1.xpose.msra.mxu0 0.0
        %874 = vmatprep.subr.mxu0 0.0
        %875 = vmatpush1.xpose.msra.mxu0 0.0
        %876 = vmatprep.subr.mxu0 0.0
        %877 = vmatpush1.xpose.msra.mxu0 0.0
        %878 = vmatprep.subr.mxu0 0.0
        %879 = vmatpush1.xpose.msra.mxu0 0.0
        %880 = vmatprep.subr.mxu0 0.0
        %881 = vmatpush1.xpose.msra.mxu0 0.0
        %882 = vmatprep.subr.mxu0 0.0
        %883 = vmatpush1.xpose.msra.mxu0 0.0
        %884 = vmatprep.subr.mxu0 0.0
        %885 = vmatpush1.xpose.msra.mxu0 0.0
        %886 = vmatprep.subr.mxu0 0.0
        %887 = vmatpush1.xpose.msra.mxu0 0.0
        %888 = vmatprep.subr.mxu0 0.0
        %889 = vmatpush1.xpose.msra.mxu0 0.0
        %890 = vmatprep.subr.mxu0 0.0
        %891 = vmatpush1.xpose.msra.mxu0 0.0
        %892 = vmatprep.subr.mxu0 0.0
        %893 = vmatpush1.xpose.msra.mxu0 0.0
        %894 = vmatprep.mubr.f32.mxu0 0.0
        %895 = vmatmul.mubr.f32.gmra.mrb[0].mxu0 %v826
        %v896 = vpop.f32.mrb[0].mxu0
        %v897 = vadd.f32 0.0, %v896
        %v898 = vpop.f32.mrb[0].mxu0
        %899 = vdwg.mxu0
        %v900 = vsel %vm404, %v897, -inf
        %901 = vmax.xlane.f32.xlu0 %v900
        %v902 = vpop.xlane.xlu0 %901
        %v903 = vsub.f32 %v897, %v902
        %v904 = vmul.f32 %v903, 1.442695
        %v905 = vpow.pop %v904
        %v906 = vsel %vm404, %v905, 0.0
        %907 = vadd.xlane.f32.xlu0 %v906
        %v908 = vpop.xlane.xlu0 %907
        %909 = vrot.lane.b32.xlu0 %v325, 52
        %v910 = vpop.permute.xlu0 %909
        %v913 = vsel %vm404, %v905, 0
        %915 = vmatprep.subr.mxu0 0.0
        %916 = vmatpush1.msra.mxu0 %v910
        %917 = vmatprep.subr.mxu0 0.0
        %918 = vmatpush1.msra.mxu0 0.0
        %919 = vmatprep.subr.mxu0 0.0
        %920 = vmatpush1.msra.mxu0 0.0
        %921 = vmatprep.subr.mxu0 0.0
        %922 = vmatpush1.msra.mxu0 0.0
        %923 = vmatprep.subr.mxu0 0.0
        %924 = vmatpush1.msra.mxu0 0.0
        %925 = vmatprep.subr.mxu0 0.0
        %926 = vmatpush1.msra.mxu0 0.0
        %927 = vmatprep.subr.mxu0 0.0
        %928 = vmatpush1.msra.mxu0 0.0
        %929 = vmatprep.subr.mxu0 0.0
        %930 = vmatpush1.msra.mxu0 0.0
        %931 = vmatprep.subr.mxu0 0.0
        %932 = vmatpush1.msra.mxu0 0.0
        %933 = vmatprep.subr.mxu0 0.0
        %934 = vmatpush1.msra.mxu0 0.0
        %935 = vmatprep.subr.mxu0 0.0
        %936 = vmatpush1.msra.mxu0 0.0
        %937 = vmatprep.subr.mxu0 0.0
        %938 = vmatpush1.msra.mxu0 0.0
        %939 = vmatprep.subr.mxu0 0.0
        %940 = vmatpush1.msra.mxu0 0.0
        %941 = vmatprep.subr.mxu0 0.0
        %942 = vmatpush1.msra.mxu0 0.0
        %943 = vmatprep.subr.mxu0 0.0
        %944 = vmatpush1.msra.mxu0 0.0
        %945 = vmatprep.subr.mxu0 0.0
        %946 = vmatpush1.msra.mxu0 0.0
        %947 = vmatprep.subr.mxu0 0.0
        %948 = vmatpush1.msra.mxu0 0.0
        %949 = vmatprep.subr.mxu0 0.0
        %950 = vmatpush1.msra.mxu0 0.0
        %951 = vmatprep.subr.mxu0 0.0
        %952 = vmatpush1.msra.mxu0 0.0
        %953 = vmatprep.subr.mxu0 0.0
        %954 = vmatpush1.msra.mxu0 0.0
        %955 = vmatprep.subr.mxu0 0.0
        %956 = vmatpush1.msra.mxu0 0.0
        %957 = vmatprep.subr.mxu0 0.0
        %958 = vmatpush1.msra.mxu0 0.0
        %959 = vmatprep.subr.mxu0 0.0
        %960 = vmatpush1.msra.mxu0 0.0
        %961 = vmatprep.subr.mxu0 0.0
        %962 = vmatpush1.msra.mxu0 0.0
        %963 = vmatprep.subr.mxu0 0.0
        %964 = vmatpush1.msra.mxu0 0.0
        %965 = vmatprep.subr.mxu0 0.0
        %966 = vmatpush1.msra.mxu0 0.0
        %967 = vmatprep.subr.mxu0 0.0
        %968 = vmatpush1.msra.mxu0 0.0
        %969 = vmatprep.subr.mxu0 0.0
        %970 = vmatpush1.msra.mxu0 0.0
        %971 = vmatprep.subr.mxu0 0.0
        %972 = vmatpush1.msra.mxu0 0.0
        %973 = vmatprep.subr.mxu0 0.0
        %974 = vmatpush1.msra.mxu0 0.0
        %975 = vmatprep.subr.mxu0 0.0
        %976 = vmatpush1.msra.mxu0 0.0
        %977 = vmatprep.subr.mxu0 0.0
        %978 = vmatpush1.msra.mxu0 0.0
        %979 = vmatprep.mubr.f32.mxu0 0.0
        %980 = vmatmul.mubr.f32.gmra.mrb[0].mxu0 %v913
        %v981 = vpop.f32.mrb[0].mxu0
        %v982 = vadd.f32 0.0, %v981
        %v983 = vpop.f32.mrb[0].mxu0
        %984 = vdwg.mxu0
        %v985 = vrcp.pop %v908
        %v986 = vmul.f32 %v982, %v985
        %987 = vrot.lane.b32.xlu0 %v325, 112
        %v988 = vpop.permute.xlu0 %987
        %989 = vrot.lane.b32.xlu0 %v325, 80
        %v990 = vpop.permute.xlu0 %989
        %v991 = vsel %vm329, %v988, 0
        %v993 = vsel %vm329, %v990, 0
        %995 = vmatprep.subr.mxu0 0.0
        %996 = vmatpush1.xpose.msra.mxu0 %v993
        %997 = vmatprep.subr.mxu0 0.0
        %998 = vmatpush1.xpose.msra.mxu0 0.0
        %999 = vmatprep.subr.mxu0 0.0
        %1000 = vmatpush1.xpose.msra.mxu0 0.0
        %1001 = vmatprep.subr.mxu0 0.0
        %1002 = vmatpush1.xpose.msra.mxu0 0.0
        %1003 = vmatprep.subr.mxu0 0.0
        %1004 = vmatpush1.xpose.msra.mxu0 0.0
        %1005 = vmatprep.subr.mxu0 0.0
        %1006 = vmatpush1.xpose.msra.mxu0 0.0
        %1007 = vmatprep.subr.mxu0 0.0
        %1008 = vmatpush1.xpose.msra.mxu0 0.0
        %1009 = vmatprep.subr.mxu0 0.0
        %1010 = vmatpush1.xpose.msra.mxu0 0.0
        %1011 = vmatprep.subr.mxu0 0.0
        %1012 = vmatpush1.xpose.msra.mxu0 0.0
        %1013 = vmatprep.subr.mxu0 0.0
        %1014 = vmatpush1.xpose.msra.mxu0 0.0
        %1015 = vmatprep.subr.mxu0 0.0
        %1016 = vmatpush1.xpose.msra.mxu0 0.0
        %1017 = vmatprep.subr.mxu0 0.0
        %1018 = vmatpush1.xpose.msra.mxu0 0.0
        %1019 = vmatprep.subr.mxu0 0.0
        %1020 = vmatpush1.xpose.msra.mxu0 0.0
        %1021 = vmatprep.subr.mxu0 0.0
        %1022 = vmatpush1.xpose.msra.mxu0 0.0
        %1023 = vmatprep.subr.mxu0 0.0
        %1024 = vmatpush1.xpose.msra.mxu0 0.0
        %1025 = vmatprep.subr.mxu0 0.0
        %1026 = vmatpush1.xpose.msra.mxu0 0.0
        %1027 = vmatprep.subr.mxu0 0.0
        %1028 = vmatpush1.xpose.msra.mxu0 0.0
        %1029 = vmatprep.subr.mxu0 0.0
        %1030 = vmatpush1.xpose.msra.mxu0 0.0
        %1031 = vmatprep.subr.mxu0 0.0
        %1032 = vmatpush1.xpose.msra.mxu0 0.0
        %1033 = vmatprep.subr.mxu0 0.0
        %1034 = vmatpush1.xpose.msra.mxu0 0.0
        %1035 = vmatprep.subr.mxu0 0.0
        %1036 = vmatpush1.xpose.msra.mxu0 0.0
        %1037 = vmatprep.subr.mxu0 0.0
        %1038 = vmatpush1.xpose.msra.mxu0 0.0
        %1039 = vmatprep.subr.mxu0 0.0
        %1040 = vmatpush1.xpose.msra.mxu0 0.0
        %1041 = vmatprep.subr.mxu0 0.0
        %1042 = vmatpush1.xpose.msra.mxu0 0.0
        %1043 = vmatprep.subr.mxu0 0.0
        %1044 = vmatpush1.xpose.msra.mxu0 0.0
        %1045 = vmatprep.subr.mxu0 0.0
        %1046 = vmatpush1.xpose.msra.mxu0 0.0
        %1047 = vmatprep.subr.mxu0 0.0
        %1048 = vmatpush1.xpose.msra.mxu0 0.0
        %1049 = vmatprep.subr.mxu0 0.0
        %1050 = vmatpush1.xpose.msra.mxu0 0.0
        %1051 = vmatprep.subr.mxu0 0.0
        %1052 = vmatpush1.xpose.msra.mxu0 0.0
        %1053 = vmatprep.subr.mxu0 0.0
        %1054 = vmatpush1.xpose.msra.mxu0 0.0
        %1055 = vmatprep.subr.mxu0 0.0
        %1056 = vmatpush1.xpose.msra.mxu0 0.0
        %1057 = vmatprep.subr.mxu0 0.0
        %1058 = vmatpush1.xpose.msra.mxu0 0.0
        %1059 = vmatprep.mubr.f32.mxu0 0.0
        %1060 = vmatmul.mubr.f32.gmra.mrb[0].mxu0 %v991
        %v1061 = vpop.f32.mrb[0].mxu0
        %v1062 = vadd.f32 0.0, %v1061
        %v1063 = vpop.f32.mrb[0].mxu0
        %1064 = vdwg.mxu0
        %v1065 = vsel %vm404, %v1062, -inf
        %1066 = vmax.xlane.f32.xlu0 %v1065
        %v1067 = vpop.xlane.xlu0 %1066
        %v1068 = vsub.f32 %v1062, %v1067
        %v1069 = vmul.f32 %v1068, 1.442695
        %v1070 = vpow.pop %v1069
        %v1071 = vsel %vm404, %v1070, 0.0
        %1072 = vadd.xlane.f32.xlu0 %v1071
        %v1073 = vpop.xlane.xlu0 %1072
        %1074 = vrot.lane.b32.xlu0 %v325, 48
        %v1075 = vpop.permute.xlu0 %1074
        %v1078 = vsel %vm404, %v1070, 0
        %1080 = vmatprep.subr.mxu0 0.0
        %1081 = vmatpush1.msra.mxu0 %v1075
        %1082 = vmatprep.subr.mxu0 0.0
        %1083 = vmatpush1.msra.mxu0 0.0
        %1084 = vmatprep.subr.mxu0 0.0
        %1085 = vmatpush1.msra.mxu0 0.0
        %1086 = vmatprep.subr.mxu0 0.0
        %1087 = vmatpush1.msra.mxu0 0.0
        %1088 = vmatprep.subr.mxu0 0.0
        %1089 = vmatpush1.msra.mxu0 0.0
        %1090 = vmatprep.subr.mxu0 0.0
        %1091 = vmatpush1.msra.mxu0 0.0
        %1092 = vmatprep.subr.mxu0 0.0
        %1093 = vmatpush1.msra.mxu0 0.0
        %1094 = vmatprep.subr.mxu0 0.0
        %1095 = vmatpush1.msra.mxu0 0.0
        %1096 = vmatprep.subr.mxu0 0.0
        %1097 = vmatpush1.msra.mxu0 0.0
        %1098 = vmatprep.subr.mxu0 0.0
        %1099 = vmatpush1.msra.mxu0 0.0
        %1100 = vmatprep.subr.mxu0 0.0
        %1101 = vmatpush1.msra.mxu0 0.0
        %1102 = vmatprep.subr.mxu0 0.0
        %1103 = vmatpush1.msra.mxu0 0.0
        %1104 = vmatprep.subr.mxu0 0.0
        %1105 = vmatpush1.msra.mxu0 0.0
        %1106 = vmatprep.subr.mxu0 0.0
        %1107 = vmatpush1.msra.mxu0 0.0
        %1108 = vmatprep.subr.mxu0 0.0
        %1109 = vmatpush1.msra.mxu0 0.0
        %1110 = vmatprep.subr.mxu0 0.0
        %1111 = vmatpush1.msra.mxu0 0.0
        %1112 = vmatprep.subr.mxu0 0.0
        %1113 = vmatpush1.msra.mxu0 0.0
        %1114 = vmatprep.subr.mxu0 0.0
        %1115 = vmatpush1.msra.mxu0 0.0
        %1116 = vmatprep.subr.mxu0 0.0
        %1117 = vmatpush1.msra.mxu0 0.0
        %1118 = vmatprep.subr.mxu0 0.0
        %1119 = vmatpush1.msra.mxu0 0.0
        %1120 = vmatprep.subr.mxu0 0.0
        %1121 = vmatpush1.msra.mxu0 0.0
        %1122 = vmatprep.subr.mxu0 0.0
        %1123 = vmatpush1.msra.mxu0 0.0
        %1124 = vmatprep.subr.mxu0 0.0
        %1125 = vmatpush1.msra.mxu0 0.0
        %1126 = vmatprep.subr.mxu0 0.0
        %1127 = vmatpush1.msra.mxu0 0.0
        %1128 = vmatprep.subr.mxu0 0.0
        %1129 = vmatpush1.msra.mxu0 0.0
        %1130 = vmatprep.subr.mxu0 0.0
        %1131 = vmatpush1.msra.mxu0 0.0
        %1132 = vmatprep.subr.mxu0 0.0
        %1133 = vmatpush1.msra.mxu0 0.0
        %1134 = vmatprep.subr.mxu0 0.0
        %1135 = vmatpush1.msra.mxu0 0.0
        %1136 = vmatprep.subr.mxu0 0.0
        %1137 = vmatpush1.msra.mxu0 0.0
        %1138 = vmatprep.subr.mxu0 0.0
        %1139 = vmatpush1.msra.mxu0 0.0
        %1140 = vmatprep.subr.mxu0 0.0
        %1141 = vmatpush1.msra.mxu0 0.0
        %1142 = vmatprep.subr.mxu0 0.0
        %1143 = vmatpush1.msra.mxu0 0.0
        %1144 = vmatprep.mubr.f32.mxu0 0.0
        %1145 = vmatmul.mubr.f32.gmra.mrb[0].mxu0 %v1078
        %v1146 = vpop.f32.mrb[0].mxu0
        %v1147 = vadd.f32 0.0, %v1146
        %v1148 = vpop.f32.mrb[0].mxu0
        %1149 = vdwg.mxu0
        %v1150 = vrcp.pop %v1073
        %v1151 = vmul.f32 %v1147, %v1150
        %1152 = vrot.lane.b32.xlu0 %v325, 108
        %v1153 = vpop.permute.xlu0 %1152
        %1154 = vrot.lane.b32.xlu0 %v325, 76
        %v1155 = vpop.permute.xlu0 %1154
        %v1156 = vsel %vm329, %v1153, 0
        %v1158 = vsel %vm329, %v1155, 0
        %1160 = vmatprep.subr.mxu0 0.0
        %1161 = vmatpush1.xpose.msra.mxu0 %v1158
        %1162 = vmatprep.subr.mxu0 0.0
        %1163 = vmatpush1.xpose.msra.mxu0 0.0
        %1164 = vmatprep.subr.mxu0 0.0
        %1165 = vmatpush1.xpose.msra.mxu0 0.0
        %1166 = vmatprep.subr.mxu0 0.0
        %1167 = vmatpush1.xpose.msra.mxu0 0.0
        %1168 = vmatprep.subr.mxu0 0.0
        %1169 = vmatpush1.xpose.msra.mxu0 0.0
        %1170 = vmatprep.subr.mxu0 0.0
        %1171 = vmatpush1.xpose.msra.mxu0 0.0
        %1172 = vmatprep.subr.mxu0 0.0
        %1173 = vmatpush1.xpose.msra.mxu0 0.0
        %1174 = vmatprep.subr.mxu0 0.0
        %1175 = vmatpush1.xpose.msra.mxu0 0.0
        %1176 = vmatprep.subr.mxu0 0.0
        %1177 = vmatpush1.xpose.msra.mxu0 0.0
        %1178 = vmatprep.subr.mxu0 0.0
        %1179 = vmatpush1.xpose.msra.mxu0 0.0
        %1180 = vmatprep.subr.mxu0 0.0
        %1181 = vmatpush1.xpose.msra.mxu0 0.0
        %1182 = vmatprep.subr.mxu0 0.0
        %1183 = vmatpush1.xpose.msra.mxu0 0.0
        %1184 = vmatprep.subr.mxu0 0.0
        %1185 = vmatpush1.xpose.msra.mxu0 0.0
        %1186 = vmatprep.subr.mxu0 0.0
        %1187 = vmatpush1.xpose.msra.mxu0 0.0
        %1188 = vmatprep.subr.mxu0 0.0
        %1189 = vmatpush1.xpose.msra.mxu0 0.0
        %1190 = vmatprep.subr.mxu0 0.0
        %1191 = vmatpush1.xpose.msra.mxu0 0.0
        %1192 = vmatprep.subr.mxu0 0.0
        %1193 = vmatpush1.xpose.msra.mxu0 0.0
        %1194 = vmatprep.subr.mxu0 0.0
        %1195 = vmatpush1.xpose.msra.mxu0 0.0
        %1196 = vmatprep.subr.mxu0 0.0
        %1197 = vmatpush1.xpose.msra.mxu0 0.0
        %1198 = vmatprep.subr.mxu0 0.0
        %1199 = vmatpush1.xpose.msra.mxu0 0.0
        %1200 = vmatprep.subr.mxu0 0.0
        %1201 = vmatpush1.xpose.msra.mxu0 0.0
        %1202 = vmatprep.subr.mxu0 0.0
        %1203 = vmatpush1.xpose.msra.mxu0 0.0
        %1204 = vmatprep.subr.mxu0 0.0
        %1205 = vmatpush1.xpose.msra.mxu0 0.0
        %1206 = vmatprep.subr.mxu0 0.0
        %1207 = vmatpush1.xpose.msra.mxu0 0.0
        %1208 = vmatprep.subr.mxu0 0.0
        %1209 = vmatpush1.xpose.msra.mxu0 0.0
        %1210 = vmatprep.subr.mxu0 0.0
        %1211 = vmatpush1.xpose.msra.mxu0 0.0
        %1212 = vmatprep.subr.mxu0 0.0
        %1213 = vmatpush1.xpose.msra.mxu0 0.0
        %1214 = vmatprep.subr.mxu0 0.0
        %1215 = vmatpush1.xpose.msra.mxu0 0.0
        %1216 = vmatprep.subr.mxu0 0.0
        %1217 = vmatpush1.xpose.msra.mxu0 0.0
        %1218 = vmatprep.subr.mxu0 0.0
        %1219 = vmatpush1.xpose.msra.mxu0 0.0
        %1220 = vmatprep.subr.mxu0 0.0
        %1221 = vmatpush1.xpose.msra.mxu0 0.0
        %1222 = vmatprep.subr.mxu0 0.0
        %1223 = vmatpush1.xpose.msra.mxu0 0.0
        %1224 = vmatprep.mubr.f32.mxu0 0.0
        %1225 = vmatmul.mubr.f32.gmra.mrb[0].mxu0 %v1156
        %v1226 = vpop.f32.mrb[0].mxu0
        %v1227 = vadd.f32 0.0, %v1226
        %v1228 = vpop.f32.mrb[0].mxu0
        %1229 = vdwg.mxu0
        %v1230 = vsel %vm404, %v1227, -inf
        %1231 = vmax.xlane.f32.xlu0 %v1230
        %v1232 = vpop.xlane.xlu0 %1231
        %v1233 = vsub.f32 %v1227, %v1232
        %v1234 = vmul.f32 %v1233, 1.442695
        %v1235 = vpow.pop %v1234
        %v1236 = vsel %vm404, %v1235, 0.0
        %1237 = vadd.xlane.f32.xlu0 %v1236
        %v1238 = vpop.xlane.xlu0 %1237
        %1239 = vrot.lane.b32.xlu0 %v325, 44
        %v1240 = vpop.permute.xlu0 %1239
        %v1243 = vsel %vm404, %v1235, 0
        %1245 = vmatprep.subr.mxu0 0.0
        %1246 = vmatpush1.msra.mxu0 %v1240
        %1247 = vmatprep.subr.mxu0 0.0
        %1248 = vmatpush1.msra.mxu0 0.0
        %1249 = vmatprep.subr.mxu0 0.0
        %1250 = vmatpush1.msra.mxu0 0.0
        %1251 = vmatprep.subr.mxu0 0.0
        %1252 = vmatpush1.msra.mxu0 0.0
        %1253 = vmatprep.subr.mxu0 0.0
        %1254 = vmatpush1.msra.mxu0 0.0
        %1255 = vmatprep.subr.mxu0 0.0
        %1256 = vmatpush1.msra.mxu0 0.0
        %1257 = vmatprep.subr.mxu0 0.0
        %1258 = vmatpush1.msra.mxu0 0.0
        %1259 = vmatprep.subr.mxu0 0.0
        %1260 = vmatpush1.msra.mxu0 0.0
        %1261 = vmatprep.subr.mxu0 0.0
        %1262 = vmatpush1.msra.mxu0 0.0
        %1263 = vmatprep.subr.mxu0 0.0
        %1264 = vmatpush1.msra.mxu0 0.0
        %1265 = vmatprep.subr.mxu0 0.0
        %1266 = vmatpush1.msra.mxu0 0.0
        %1267 = vmatprep.subr.mxu0 0.0
        %1268 = vmatpush1.msra.mxu0 0.0
        %1269 = vmatprep.subr.mxu0 0.0
        %1270 = vmatpush1.msra.mxu0 0.0
        %1271 = vmatprep.subr.mxu0 0.0
        %1272 = vmatpush1.msra.mxu0 0.0
        %1273 = vmatprep.subr.mxu0 0.0
        %1274 = vmatpush1.msra.mxu0 0.0
        %1275 = vmatprep.subr.mxu0 0.0
        %1276 = vmatpush1.msra.mxu0 0.0
        %1277 = vmatprep.subr.mxu0 0.0
        %1278 = vmatpush1.msra.mxu0 0.0
        %1279 = vmatprep.subr.mxu0 0.0
        %1280 = vmatpush1.msra.mxu0 0.0
        %1281 = vmatprep.subr.mxu0 0.0
        %1282 = vmatpush1.msra.mxu0 0.0
        %1283 = vmatprep.subr.mxu0 0.0
        %1284 = vmatpush1.msra.mxu0 0.0
        %1285 = vmatprep.subr.mxu0 0.0
        %1286 = vmatpush1.msra.mxu0 0.0
        %1287 = vmatprep.subr.mxu0 0.0
        %1288 = vmatpush1.msra.mxu0 0.0
        %1289 = vmatprep.subr.mxu0 0.0
        %1290 = vmatpush1.msra.mxu0 0.0
        %1291 = vmatprep.subr.mxu0 0.0
        %1292 = vmatpush1.msra.mxu0 0.0
        %1293 = vmatprep.subr.mxu0 0.0
        %1294 = vmatpush1.msra.mxu0 0.0
        %1295 = vmatprep.subr.mxu0 0.0
        %1296 = vmatpush1.msra.mxu0 0.0
        %1297 = vmatprep.subr.mxu0 0.0
        %1298 = vmatpush1.msra.mxu0 0.0
        %1299 = vmatprep.subr.mxu0 0.0
        %1300 = vmatpush1.msra.mxu0 0.0
        %1301 = vmatprep.subr.mxu0 0.0
        %1302 = vmatpush1.msra.mxu0 0.0
        %1303 = vmatprep.subr.mxu0 0.0
        %1304 = vmatpush1.msra.mxu0 0.0
        %1305 = vmatprep.subr.mxu0 0.0
        %1306 = vmatpush1.msra.mxu0 0.0
        %1307 = vmatprep.subr.mxu0 0.0
        %1308 = vmatpush1.msra.mxu0 0.0
        %1309 = vmatprep.mubr.f32.mxu0 0.0
        %1310 = vmatmul.mubr.f32.gmra.mrb[0].mxu0 %v1243
        %v1311 = vpop.f32.mrb[0].mxu0
        %v1312 = vadd.f32 0.0, %v1311
        %v1313 = vpop.f32.mrb[0].mxu0
        %1314 = vdwg.mxu0
        %v1315 = vrcp.pop %v1238
        %v1316 = vmul.f32 %v1312, %v1315
        %1317 = vrot.lane.b32.xlu0 %v325, 104
        %v1318 = vpop.permute.xlu0 %1317
        %1319 = vrot.lane.b32.xlu0 %v325, 72
        %v1320 = vpop.permute.xlu0 %1319
        %v1321 = vsel %vm329, %v1318, 0
        %v1323 = vsel %vm329, %v1320, 0
        %1325 = vmatprep.subr.mxu0 0.0
        %1326 = vmatpush1.xpose.msra.mxu0 %v1323
        %1327 = vmatprep.subr.mxu0 0.0
        %1328 = vmatpush1.xpose.msra.mxu0 0.0
        %1329 = vmatprep.subr.mxu0 0.0
        %1330 = vmatpush1.xpose.msra.mxu0 0.0
        %1331 = vmatprep.subr.mxu0 0.0
        %1332 = vmatpush1.xpose.msra.mxu0 0.0
        %1333 = vmatprep.subr.mxu0 0.0
        %1334 = vmatpush1.xpose.msra.mxu0 0.0
        %1335 = vmatprep.subr.mxu0 0.0
        %1336 = vmatpush1.xpose.msra.mxu0 0.0
        %1337 = vmatprep.subr.mxu0 0.0
        %1338 = vmatpush1.xpose.msra.mxu0 0.0
        %1339 = vmatprep.subr.mxu0 0.0
        %1340 = vmatpush1.xpose.msra.mxu0 0.0
        %1341 = vmatprep.subr.mxu0 0.0
        %1342 = vmatpush1.xpose.msra.mxu0 0.0
        %1343 = vmatprep.subr.mxu0 0.0
        %1344 = vmatpush1.xpose.msra.mxu0 0.0
        %1345 = vmatprep.subr.mxu0 0.0
        %1346 = vmatpush1.xpose.msra.mxu0 0.0
        %1347 = vmatprep.subr.mxu0 0.0
        %1348 = vmatpush1.xpose.msra.mxu0 0.0
        %1349 = vmatprep.subr.mxu0 0.0
        %1350 = vmatpush1.xpose.msra.mxu0 0.0
        %1351 = vmatprep.subr.mxu0 0.0
        %1352 = vmatpush1.xpose.msra.mxu0 0.0
        %1353 = vmatprep.subr.mxu0 0.0
        %1354 = vmatpush1.xpose.msra.mxu0 0.0
        %1355 = vmatprep.subr.mxu0 0.0
        %1356 = vmatpush1.xpose.msra.mxu0 0.0
        %1357 = vmatprep.subr.mxu0 0.0
        %1358 = vmatpush1.xpose.msra.mxu0 0.0
        %1359 = vmatprep.subr.mxu0 0.0
        %1360 = vmatpush1.xpose.msra.mxu0 0.0
        %1361 = vmatprep.subr.mxu0 0.0
        %1362 = vmatpush1.xpose.msra.mxu0 0.0
        %1363 = vmatprep.subr.mxu0 0.0
        %1364 = vmatpush1.xpose.msra.mxu0 0.0
        %1365 = vmatprep.subr.mxu0 0.0
        %1366 = vmatpush1.xpose.msra.mxu0 0.0
        %1367 = vmatprep.subr.mxu0 0.0
        %1368 = vmatpush1.xpose.msra.mxu0 0.0
        %1369 = vmatprep.subr.mxu0 0.0
        %1370 = vmatpush1.xpose.msra.mxu0 0.0
        %1371 = vmatprep.subr.mxu0 0.0
        %1372 = vmatpush1.xpose.msra.mxu0 0.0
        %1373 = vmatprep.subr.mxu0 0.0
        %1374 = vmatpush1.xpose.msra.mxu0 0.0
        %1375 = vmatprep.subr.mxu0 0.0
        %1376 = vmatpush1.xpose.msra.mxu0 0.0
        %1377 = vmatprep.subr.mxu0 0.0
        %1378 = vmatpush1.xpose.msra.mxu0 0.0
        %1379 = vmatprep.subr.mxu0 0.0
        %1380 = vmatpush1.xpose.msra.mxu0 0.0
        %1381 = vmatprep.subr.mxu0 0.0
        %1382 = vmatpush1.xpose.msra.mxu0 0.0
        %1383 = vmatprep.subr.mxu0 0.0
        %1384 = vmatpush1.xpose.msra.mxu0 0.0
        %1385 = vmatprep.subr.mxu0 0.0
        %1386 = vmatpush1.xpose.msra.mxu0 0.0
        %1387 = vmatprep.subr.mxu0 0.0
        %1388 = vmatpush1.xpose.msra.mxu0 0.0
        %1389 = vmatprep.mubr.f32.mxu0 0.0
        %1390 = vmatmul.mubr.f32.gmra.mrb[0].mxu0 %v1321
        %v1391 = vpop.f32.mrb[0].mxu0
        %v1392 = vadd.f32 0.0, %v1391
        %v1393 = vpop.f32.mrb[0].mxu0
        %1394 = vdwg.mxu0
        %v1395 = vsel %vm404, %v1392, -inf
        %1396 = vmax.xlane.f32.xlu0 %v1395
        %v1397 = vpop.xlane.xlu0 %1396
        %v1398 = vsub.f32 %v1392, %v1397
        %v1399 = vmul.f32 %v1398, 1.442695
        %v1400 = vpow.pop %v1399
        %v1401 = vsel %vm404, %v1400, 0.0
        %1402 = vadd.xlane.f32.xlu0 %v1401
        %v1403 = vpop.xlane.xlu0 %1402
        %1404 = vrot.lane.b32.xlu0 %v325, 40
        %v1405 = vpop.permute.xlu0 %1404
        %v1408 = vsel %vm404, %v1400, 0
        %1410 = vmatprep.subr.mxu0 0.0
        %1411 = vmatpush1.msra.mxu0 %v1405
        %1412 = vmatprep.subr.mxu0 0.0
        %1413 = vmatpush1.msra.mxu0 0.0
        %1414 = vmatprep.subr.mxu0 0.0
        %1415 = vmatpush1.msra.mxu0 0.0
        %1416 = vmatprep.subr.mxu0 0.0
        %1417 = vmatpush1.msra.mxu0 0.0
        %1418 = vmatprep.subr.mxu0 0.0
        %1419 = vmatpush1.msra.mxu0 0.0
        %1420 = vmatprep.subr.mxu0 0.0
        %1421 = vmatpush1.msra.mxu0 0.0
        %1422 = vmatprep.subr.mxu0 0.0
        %1423 = vmatpush1.msra.mxu0 0.0
        %1424 = vmatprep.subr.mxu0 0.0
        %1425 = vmatpush1.msra.mxu0 0.0
        %1426 = vmatprep.subr.mxu0 0.0
        %1427 = vmatpush1.msra.mxu0 0.0
        %1428 = vmatprep.subr.mxu0 0.0
        %1429 = vmatpush1.msra.mxu0 0.0
        %1430 = vmatprep.subr.mxu0 0.0
        %1431 = vmatpush1.msra.mxu0 0.0
        %1432 = vmatprep.subr.mxu0 0.0
        %1433 = vmatpush1.msra.mxu0 0.0
        %1434 = vmatprep.subr.mxu0 0.0
        %1435 = vmatpush1.msra.mxu0 0.0
        %1436 = vmatprep.subr.mxu0 0.0
        %1437 = vmatpush1.msra.mxu0 0.0
        %1438 = vmatprep.subr.mxu0 0.0
        %1439 = vmatpush1.msra.mxu0 0.0
        %1440 = vmatprep.subr.mxu0 0.0
        %1441 = vmatpush1.msra.mxu0 0.0
        %1442 = vmatprep.subr.mxu0 0.0
        %1443 = vmatpush1.msra.mxu0 0.0
        %1444 = vmatprep.subr.mxu0 0.0
        %1445 = vmatpush1.msra.mxu0 0.0
        %1446 = vmatprep.subr.mxu0 0.0
        %1447 = vmatpush1.msra.mxu0 0.0
        %1448 = vmatprep.subr.mxu0 0.0
        %1449 = vmatpush1.msra.mxu0 0.0
        %1450 = vmatprep.subr.mxu0 0.0
        %1451 = vmatpush1.msra.mxu0 0.0
        %1452 = vmatprep.subr.mxu0 0.0
        %1453 = vmatpush1.msra.mxu0 0.0
        %1454 = vmatprep.subr.mxu0 0.0
        %1455 = vmatpush1.msra.mxu0 0.0
        %1456 = vmatprep.subr.mxu0 0.0
        %1457 = vmatpush1.msra.mxu0 0.0
        %1458 = vmatprep.subr.mxu0 0.0
        %1459 = vmatpush1.msra.mxu0 0.0
        %1460 = vmatprep.subr.mxu0 0.0
        %1461 = vmatpush1.msra.mxu0 0.0
        %1462 = vmatprep.subr.mxu0 0.0
        %1463 = vmatpush1.msra.mxu0 0.0
        %1464 = vmatprep.subr.mxu0 0.0
        %1465 = vmatpush1.msra.mxu0 0.0
        %1466 = vmatprep.subr.mxu0 0.0
        %1467 = vmatpush1.msra.mxu0 0.0
        %1468 = vmatprep.subr.mxu0 0.0
        %1469 = vmatpush1.msra.mxu0 0.0
        %1470 = vmatprep.subr.mxu0 0.0
        %1471 = vmatpush1.msra.mxu0 0.0
        %1472 = vmatprep.subr.mxu0 0.0
        %1473 = vmatpush1.msra.mxu0 0.0
        %1474 = vmatprep.mubr.f32.mxu0 0.0
        %1475 = vmatmul.mubr.f32.gmra.mrb[0].mxu0 %v1408
        %v1476 = vpop.f32.mrb[0].mxu0
        %v1477 = vadd.f32 0.0, %v1476
        %v1478 = vpop.f32.mrb[0].mxu0
        %1479 = vdwg.mxu0
        %v1480 = vrcp.pop %v1403
        %v1481 = vmul.f32 %v1477, %v1480
        %1482 = vrot.lane.b32.xlu0 %v325, 100
        %v1483 = vpop.permute.xlu0 %1482
        %1484 = vrot.lane.b32.xlu0 %v325, 68
        %v1485 = vpop.permute.xlu0 %1484
        %v1486 = vsel %vm329, %v1483, 0
        %v1488 = vsel %vm329, %v1485, 0
        %1490 = vmatprep.subr.mxu0 0.0
        %1491 = vmatpush1.xpose.msra.mxu0 %v1488
        %1492 = vmatprep.subr.mxu0 0.0
        %1493 = vmatpush1.xpose.msra.mxu0 0.0
        %1494 = vmatprep.subr.mxu0 0.0
        %1495 = vmatpush1.xpose.msra.mxu0 0.0
        %1496 = vmatprep.subr.mxu0 0.0
        %1497 = vmatpush1.xpose.msra.mxu0 0.0
        %1498 = vmatprep.subr.mxu0 0.0
        %1499 = vmatpush1.xpose.msra.mxu0 0.0
        %1500 = vmatprep.subr.mxu0 0.0
        %1501 = vmatpush1.xpose.msra.mxu0 0.0
        %1502 = vmatprep.subr.mxu0 0.0
        %1503 = vmatpush1.xpose.msra.mxu0 0.0
        %1504 = vmatprep.subr.mxu0 0.0
        %1505 = vmatpush1.xpose.msra.mxu0 0.0
        %1506 = vmatprep.subr.mxu0 0.0
        %1507 = vmatpush1.xpose.msra.mxu0 0.0
        %1508 = vmatprep.subr.mxu0 0.0
        %1509 = vmatpush1.xpose.msra.mxu0 0.0
        %1510 = vmatprep.subr.mxu0 0.0
        %1511 = vmatpush1.xpose.msra.mxu0 0.0
        %1512 = vmatprep.subr.mxu0 0.0
        %1513 = vmatpush1.xpose.msra.mxu0 0.0
        %1514 = vmatprep.subr.mxu0 0.0
        %1515 = vmatpush1.xpose.msra.mxu0 0.0
        %1516 = vmatprep.subr.mxu0 0.0
        %1517 = vmatpush1.xpose.msra.mxu0 0.0
        %1518 = vmatprep.subr.mxu0 0.0
        %1519 = vmatpush1.xpose.msra.mxu0 0.0
        %1520 = vmatprep.subr.mxu0 0.0
        %1521 = vmatpush1.xpose.msra.mxu0 0.0
        %1522 = vmatprep.subr.mxu0 0.0
        %1523 = vmatpush1.xpose.msra.mxu0 0.0
        %1524 = vmatprep.subr.mxu0 0.0
        %1525 = vmatpush1.xpose.msra.mxu0 0.0
        %1526 = vmatprep.subr.mxu0 0.0
        %1527 = vmatpush1.xpose.msra.mxu0 0.0
        %1528 = vmatprep.subr.mxu0 0.0
        %1529 = vmatpush1.xpose.msra.mxu0 0.0
        %1530 = vmatprep.subr.mxu0 0.0
        %1531 = vmatpush1.xpose.msra.mxu0 0.0
        %1532 = vmatprep.subr.mxu0 0.0
        %1533 = vmatpush1.xpose.msra.mxu0 0.0
        %1534 = vmatprep.subr.mxu0 0.0
        %1535 = vmatpush1.xpose.msra.mxu0 0.0
        %1536 = vmatprep.subr.mxu0 0.0
        %1537 = vmatpush1.xpose.msra.mxu0 0.0
        %1538 = vmatprep.subr.mxu0 0.0
        %1539 = vmatpush1.xpose.msra.mxu0 0.0
        %1540 = vmatprep.subr.mxu0 0.0
        %1541 = vmatpush1.xpose.msra.mxu0 0.0
        %1542 = vmatprep.subr.mxu0 0.0
        %1543 = vmatpush1.xpose.msra.mxu0 0.0
        %1544 = vmatprep.subr.mxu0 0.0
        %1545 = vmatpush1.xpose.msra.mxu0 0.0
        %1546 = vmatprep.subr.mxu0 0.0
        %1547 = vmatpush1.xpose.msra.mxu0 0.0
        %1548 = vmatprep.subr.mxu0 0.0
        %1549 = vmatpush1.xpose.msra.mxu0 0.0
        %1550 = vmatprep.subr.mxu0 0.0
        %1551 = vmatpush1.xpose.msra.mxu0 0.0
        %1552 = vmatprep.subr.mxu0 0.0
        %1553 = vmatpush1.xpose.msra.mxu0 0.0
        %1554 = vmatprep.mubr.f32.mxu0 0.0
        %1555 = vmatmul.mubr.f32.gmra.mrb[0].mxu0 %v1486
        %v1556 = vpop.f32.mrb[0].mxu0
        %v1557 = vadd.f32 0.0, %v1556
        %v1558 = vpop.f32.mrb[0].mxu0
        %1559 = vdwg.mxu0
        %v1560 = vsel %vm404, %v1557, -inf
        %1561 = vmax.xlane.f32.xlu0 %v1560
        %v1562 = vpop.xlane.xlu0 %1561
        %v1563 = vsub.f32 %v1557, %v1562
        %v1564 = vmul.f32 %v1563, 1.442695
        %v1565 = vpow.pop %v1564
        %v1566 = vsel %vm404, %v1565, 0.0
        %1567 = vadd.xlane.f32.xlu0 %v1566
        %v1568 = vpop.xlane.xlu0 %1567
        %1569 = vrot.lane.b32.xlu0 %v325, 36
        %v1570 = vpop.permute.xlu0 %1569
        %v1573 = vsel %vm404, %v1565, 0
        %1575 = vmatprep.subr.mxu0 0.0
        %1576 = vmatpush1.msra.mxu0 %v1570
        %1577 = vmatprep.subr.mxu0 0.0
        %1578 = vmatpush1.msra.mxu0 0.0
        %1579 = vmatprep.subr.mxu0 0.0
        %1580 = vmatpush1.msra.mxu0 0.0
        %1581 = vmatprep.subr.mxu0 0.0
        %1582 = vmatpush1.msra.mxu0 0.0
        %1583 = vmatprep.subr.mxu0 0.0
        %1584 = vmatpush1.msra.mxu0 0.0
        %1585 = vmatprep.subr.mxu0 0.0
        %1586 = vmatpush1.msra.mxu0 0.0
        %1587 = vmatprep.subr.mxu0 0.0
        %1588 = vmatpush1.msra.mxu0 0.0
        %1589 = vmatprep.subr.mxu0 0.0
        %1590 = vmatpush1.msra.mxu0 0.0
        %1591 = vmatprep.subr.mxu0 0.0
        %1592 = vmatpush1.msra.mxu0 0.0
        %1593 = vmatprep.subr.mxu0 0.0
        %1594 = vmatpush1.msra.mxu0 0.0
        %1595 = vmatprep.subr.mxu0 0.0
        %1596 = vmatpush1.msra.mxu0 0.0
        %1597 = vmatprep.subr.mxu0 0.0
        %1598 = vmatpush1.msra.mxu0 0.0
        %1599 = vmatprep.subr.mxu0 0.0
        %1600 = vmatpush1.msra.mxu0 0.0
        %1601 = vmatprep.subr.mxu0 0.0
        %1602 = vmatpush1.msra.mxu0 0.0
        %1603 = vmatprep.subr.mxu0 0.0
        %1604 = vmatpush1.msra.mxu0 0.0
        %1605 = vmatprep.subr.mxu0 0.0
        %1606 = vmatpush1.msra.mxu0 0.0
        %1607 = vmatprep.subr.mxu0 0.0
        %1608 = vmatpush1.msra.mxu0 0.0
        %1609 = vmatprep.subr.mxu0 0.0
        %1610 = vmatpush1.msra.mxu0 0.0
        %1611 = vmatprep.subr.mxu0 0.0
        %1612 = vmatpush1.msra.mxu0 0.0
        %1613 = vmatprep.subr.mxu0 0.0
        %1614 = vmatpush1.msra.mxu0 0.0
        %1615 = vmatprep.subr.mxu0 0.0
        %1616 = vmatpush1.msra.mxu0 0.0
        %1617 = vmatprep.subr.mxu0 0.0
        %1618 = vmatpush1.msra.mxu0 0.0
        %1619 = vmatprep.subr.mxu0 0.0
        %1620 = vmatpush1.msra.mxu0 0.0
        %1621 = vmatprep.subr.mxu0 0.0
        %1622 = vmatpush1.msra.mxu0 0.0
        %1623 = vmatprep.subr.mxu0 0.0
        %1624 = vmatpush1.msra.mxu0 0.0
        %1625 = vmatprep.subr.mxu0 0.0
        %1626 = vmatpush1.msra.mxu0 0.0
        %1627 = vmatprep.subr.mxu0 0.0
        %1628 = vmatpush1.msra.mxu0 0.0
        %1629 = vmatprep.subr.mxu0 0.0
        %1630 = vmatpush1.msra.mxu0 0.0
        %1631 = vmatprep.subr.mxu0 0.0
        %1632 = vmatpush1.msra.mxu0 0.0
        %1633 = vmatprep.subr.mxu0 0.0
        %1634 = vmatpush1.msra.mxu0 0.0
        %1635 = vmatprep.subr.mxu0 0.0
        %1636 = vmatpush1.msra.mxu0 0.0
        %1637 = vmatprep.subr.mxu0 0.0
        %1638 = vmatpush1.msra.mxu0 0.0
        %1639 = vmatprep.mubr.f32.mxu0 0.0
        %1640 = vmatmul.mubr.f32.gmra.mrb[0].mxu0 %v1573
        %v1641 = vpop.f32.mrb[0].mxu0
        %v1642 = vadd.f32 0.0, %v1641
        %v1643 = vpop.f32.mrb[0].mxu0
        %1644 = vdwg.mxu0
        %v1645 = vrcp.pop %v1568
        %v1646 = vmul.f32 %v1642, %v1645
        %1648 = vrot.lane.b32.xlu0 %v656, 4
        %v1649 = vpop.permute.xlu0 %1648
        %1652 = vrot.lane.b32.xlu0 %v821, 8
        %v1653 = vpop.permute.xlu0 %1652
        %1656 = vrot.lane.b32.xlu0 %v986, 12
        %v1657 = vpop.permute.xlu0 %1656
        %1660 = vrot.lane.b32.xlu0 %v1151, 16
        %v1661 = vpop.permute.xlu0 %1660
        %1664 = vrot.lane.b32.xlu0 %v1316, 20
        %v1665 = vpop.permute.xlu0 %1664
        %1668 = vrot.lane.b32.xlu0 %v1481, 24
        %v1669 = vpop.permute.xlu0 %1668
        %1672 = vrot.lane.b32.xlu0 %v1646, 28
        %v1673 = vpop.permute.xlu0 %1672
        %v1675 = vsel %vm329, %v491, %v1649
        %v1676 = vsel %vm404, %v1675, %v1653
        %vm1677 = vcmask 97280
        %v1678 = vsel %vm1677, %v1676, %v1657
        %vm1679 = vcmask 130048
        %v1680 = vsel %vm1679, %v1678, %v1661
        %vm1681 = vcmask 162816
        %v1682 = vsel %vm1681, %v1680, %v1665
        %vm1683 = vcmask 195584
        %v1684 = vsel %vm1683, %v1682, %v1669
        %vm1685 = vcmask 228352
        %v1686 = vsel %vm1685, %v1684, %v1673
        %1687 = vst.msk [vmem:[#allocation3] sm:$0xff] %vm247, %v1686
        %v1688 = vld [vmem:[#allocation3] sm:$0xff]
        %v1689 = vld [vmem:[#allocation9] sm:$0xff]
        %v1690 = vld [vmem:[#allocation9 + $0x8] sm:$0xff]
        %v1691 = vld [vmem:[#allocation9 + $0x10] sm:$0xff]
        %v1692 = vld [vmem:[#allocation9 + $0x18] sm:$0xff]
        %v1693 = vld [vmem:[%s3] sm:$0x1]
        %v1695 = vlaneseq
        %v1696 = vshrl.u32 %v1695, 7
        %v1697 = vsub.s32 0, %v1696
        %v1698 = vrot.slane %v1693, %v1697
        %v1701 = vsel %vm247, %v1688, 0
        %1703 = vmatprep.subr.mxu0 0.0
        %1704 = vmatpush1.msra.mxu0 %v1689
        %1705 = vmatprep.subr.mxu0 0.0
        %1706 = vmatpush1.msra.mxu0 %v1690
        %1707 = vmatprep.subr.mxu0 0.0
        %1708 = vmatpush1.msra.mxu0 %v1691
        %1709 = vmatprep.subr.mxu0 0.0
        %1710 = vmatpush1.msra.mxu0 %v1692
        %1711 = vmatprep.subr.mxu0 0.0
        %1712 = vmatpush1.msra.mxu0 0.0
        %1713 = vmatprep.subr.mxu0 0.0
        %1714 = vmatpush1.msra.mxu0 0.0
        %1715 = vmatprep.subr.mxu0 0.0
        %1716 = vmatpush1.msra.mxu0 0.0
        %1717 = vmatprep.subr.mxu0 0.0
        %1718 = vmatpush1.msra.mxu0 0.0
        %1719 = vmatprep.subr.mxu0 0.0
        %1720 = vmatpush1.msra.mxu0 0.0
        %1721 = vmatprep.subr.mxu0 0.0
        %1722 = vmatpush1.msra.mxu0 0.0
        %1723 = vmatprep.subr.mxu0 0.0
        %1724 = vmatpush1.msra.mxu0 0.0
        %1725 = vmatprep.subr.mxu0 0.0
        %1726 = vmatpush1.msra.mxu0 0.0
        %1727 = vmatprep.subr.mxu0 0.0
        %1728 = vmatpush1.msra.mxu0 0.0
        %1729 = vmatprep.subr.mxu0 0.0
        %1730 = vmatpush1.msra.mxu0 0.0
        %1731 = vmatprep.subr.mxu0 0.0
        %1732 = vmatpush1.msra.mxu0 0.0
        %1733 = vmatprep.subr.mxu0 0.0
        %1734 = vmatpush1.msra.mxu0 0.0
        %1735 = vmatprep.subr.mxu0 0.0
        %1736 = vmatpush1.msra.mxu0 0.0
        %1737 = vmatprep.subr.mxu0 0.0
        %1738 = vmatpush1.msra.mxu0 0.0
        %1739 = vmatprep.subr.mxu0 0.0
        %1740 = vmatpush1.msra.mxu0 0.0
        %1741 = vmatprep.subr.mxu0 0.0
        %1742 = vmatpush1.msra.mxu0 0.0
        %1743 = vmatprep.subr.mxu0 0.0
        %1744 = vmatpush1.msra.mxu0 0.0
        %1745 = vmatprep.subr.mxu0 0.0
        %1746 = vmatpush1.msra.mxu0 0.0
        %1747 = vmatprep.subr.mxu0 0.0
        %1748 = vmatpush1.msra.mxu0 0.0
        %1749 = vmatprep.subr.mxu0 0.0
        %1750 = vmatpush1.msra.mxu0 0.0
        %1751 = vmatprep.subr.mxu0 0.0
        %1752 = vmatpush1.msra.mxu0 0.0
        %1753 = vmatprep.subr.mxu0 0.0
        %1754 = vmatpush1.msra.mxu0 0.0
        %1755 = vmatprep.subr.mxu0 0.0
        %1756 = vmatpush1.msra.mxu0 0.0
        %1757 = vmatprep.subr.mxu0 0.0
        %1758 = vmatpush1.msra.mxu0 0.0
        %1759 = vmatprep.subr.mxu0 0.0
        %1760 = vmatpush1.msra.mxu0 0.0
        %1761 = vmatprep.subr.mxu0 0.0
        %1762 = vmatpush1.msra.mxu0 0.0
        %1763 = vmatprep.subr.mxu0 0.0
        %1764 = vmatpush1.msra.mxu0 0.0
        %1765 = vmatprep.subr.mxu0 0.0
        %1766 = vmatpush1.msra.mxu0 0.0
        %1767 = vmatprep.mubr.f32.mxu0 0.0
        %1768 = vmatmul.mubr.f32.gmra.mrb[0].mxu0 %v1701
        %v1769 = vpop.f32.mrb[0].mxu0
        %v1770 = vadd.f32 %v1698, %v1769
        %v1771 = vpop.f32.mrb[0].mxu0
        %1772 = vdwg.mxu0
        %1773 = vst.msk [vmem:[%s241] sm:$0xff] %vm247, %v1770
        %s1774 = sand.u32 %s119, 1
        %s1775 = scalar_lea.sflag [#allocation6], %s1774
        %s1776 = sand.u32 %s119, 1
        %s1777 = smul.addr %s1776, 8
        %s1778 = scalar_lea.vmem [#allocation10], %s1777
        // Predicated region
        $region49: #{tpu_custom_call.1} parent=35 // pred_check
          %p1779 = pneg %p129
        $region50: #{tpu_custom_call.1} parent=35 // pred_check_branch
          %1781 = sbr.rel (%p1779) target = $region52
        $region51: #{tpu_custom_call.1} parent=35 // pred_region
          %s1783 = ssub.s32 128, 128
          %1784 = vsyncadd %s1775, %s1783
          %s1785 = smul.addr %s22, 128
          %s1786 = scalar_lea.hbm %s4, %s1785
          %s1788 = sshll.u32 %s1778, 4
          %s1789 = int_to_ptr.vmem [resolvable:$true] %s1788
          %1791 = dma.vmem_to_hbm [thread:$0]  %s1789, 128, %s1786, %s1775
        $region52: #{tpu_custom_call.1} parent=35 // pred_fallthru
          _
      $region36: #{tpu_custom_call.1} parent=5 // pred_fallthru
        _
      %p1792 = scmp.le.s32.totalorder 2, %s17
      // Predicated region
      $region53: #{tpu_custom_call.1} parent=5 // pred_check
        %p1793 = pneg %p1792
      $region54: #{tpu_custom_call.1} parent=5 // pred_check_branch
        %1795 = sbr.rel (%p1793) target = $region56
      $region55: #{tpu_custom_call.1} parent=5 // pred_region
        %s1796 = ssub.s32 %s17, 2
        // Predicated region
        $region57: #{tpu_custom_call.1} parent=55 // pred_check
          %p1797 = pneg %p135
        $region58: #{tpu_custom_call.1} parent=55 // pred_check_branch
          %1799 = sbr.rel (%p1797) target = $region60
        $region59: #{tpu_custom_call.1} parent=55 // pred_region
          %s1800 = sand.u32 %s120, 1
          %s1801 = scalar_lea.sflag [#allocation6], %s1800
          %s1802 = sand.u32 %s120, 1
          %s1803 = smul.addr %s1802, 8
          %s1804 = scalar_lea.vmem [#allocation10], %s1803
          %1805 = dma.done %s1801, 128
        $region60: #{tpu_custom_call.1} parent=55 // pred_fallthru
          _
      $region56: #{tpu_custom_call.1} parent=5 // pred_fallthru
        _
    $region6: #{tpu_custom_call.1} parent=1 // loop_footer
      %s21 = sadd.s32 1, %s17
    $region7: #{tpu_custom_call.1} parent=1 // loop_footer_branch
      %16 = sbr.rel target = $region3
    $region8: #{tpu_custom_call.1} parent=1 // loop_exit
      _
    %1806 = vsyncpa [#allocation5], 1
    %s1807 = scalar_lea.sflag [#allocation5], 1
    %1808 = vsyncpa %s1807, 1
    %1809 = vsyncpa [#allocation8], 1
    %1810 = vsyncpa [#allocation6], 1
    %s1811 = scalar_lea.sflag [#allocation6], 1
    %1812 = vsyncpa %s1811, 1

</llo_original>
